<compile_context>
chip_gen: v7x
topology: tpu7x:2x2x1
jax: 0.10.0
libtpu: 0.0.40
codegen_flags: <defaults>
</compile_context>

<pallas_src>
import functools
import math

import jax
import jax.numpy as jnp
from jax import lax
from jax.experimental import pallas as pl
from jax.experimental.pallas import tpu as pltpu

LN_EPS = 1e-5


def _layernorm_joint(h3, w, b):
    """LayerNorm over the (S, E) slab of each batch element. h3: (Bt, S, E)."""
    inv_n = 1.0 / (h3.shape[1] * h3.shape[2])
    # One-pass statistics: lane reduction (E) then sublane reduction (S).
    s1 = jnp.sum(jnp.sum(h3, axis=2, keepdims=True), axis=1, keepdims=True)
    s2 = jnp.sum(jnp.sum(h3 * h3, axis=2, keepdims=True), axis=1, keepdims=True)
    mu = s1 * inv_n
    var = s2 * inv_n - mu * mu
    return (h3 - mu) * lax.rsqrt(var + LN_EPS) * w + b


def featureformer_kernel(num_heads,
                         x_ref,
                         wqkv_ref, bqkv_ref,
                         wo_ref, bo_ref,
                         ln1w_ref, ln1b_ref,
                         wl_ref, bl_ref,
                         ln2w_ref, ln2b_ref,
                         o_ref,
                         attn_ref):
    Bt, S, E = x_ref.shape
    H = num_heads
    Dh = E // H

    x3 = x_ref[...]                      # (Bt, S, E)
    x2 = x3.reshape(Bt * S, E)           # flatten batch*seq rows for dense matmuls

    # --- fused Q/K/V in-projection (single MXU matmul; q is pre-scaled by 1/sqrt(Dh)) ---
    qkv = jnp.dot(x2, wqkv_ref[...], preferred_element_type=jnp.float32) + bqkv_ref[...]
    q = qkv[:, 0 * E:1 * E].reshape(Bt, S, E)
    k = qkv[:, 1 * E:2 * E].reshape(Bt, S, E)
    v = qkv[:, 2 * E:3 * E].reshape(Bt, S, E)

    # --- per-head scaled-dot-product attention, batched over the batch block ---
    for h in range(H):
        sl = slice(h * Dh, (h + 1) * Dh)
        qh = q[:, :, sl]
        kh = k[:, :, sl]
        vh = v[:, :, sl]
        s = jnp.einsum("bqd,bkd->bqk", qh, kh, preferred_element_type=jnp.float32)
        s = s - jnp.max(s, axis=-1, keepdims=True)
        p = jnp.exp(s)
        # NOTE: pl.reciprocal(..., approx=True) would move this onto the idle EUP slot,
        # but the exact form keeps the kernel within 1e-4 of the f32 reference.
        p = p * pl.reciprocal(jnp.sum(p, axis=-1, keepdims=True), approx=False)
        attn_ref[:, :, sl] = jnp.einsum("bqk,bkd->bqd", p, vh,
                                        preferred_element_type=jnp.float32)

    # --- output projection ---
    attn2 = attn_ref[...].reshape(Bt * S, E)
    attn_out = jnp.dot(attn2, wo_ref[...], preferred_element_type=jnp.float32) + bo_ref[...]

    # --- residual + LayerNorm1 over (S, E) ---
    h1 = (x2 + attn_out).reshape(Bt, S, E)
    n1 = _layernorm_joint(h1, ln1w_ref[...], ln1b_ref[...])

    # --- feed-forward linear ---
    lin = jnp.dot(n1.reshape(Bt * S, E), wl_ref[...],
                  preferred_element_type=jnp.float32) + bl_ref[...]

    # --- residual + LayerNorm2 over (S, E) ---
    h2 = n1 + lin.reshape(Bt, S, E)
    o_ref[...] = _layernorm_joint(h2, ln2w_ref[...], ln2b_ref[...]).astype(o_ref.dtype)


def _pick_block_b(batch, window):
    """Batch-block size: aim for ~128 activation rows (block_b*S) per grid step,
    and keep >= 2 grid steps (both v7x TensorCores busy) when batch allows it."""
    target = max(1, 128 // max(window, 1))
    divisors = [d for d in range(1, batch + 1) if batch % d == 0 and d <= target]
    bb = max(divisors)
    if batch // bb < 2:
        alt = [d for d in divisors if batch // d >= 2 and d * window >= 64]
        if alt:
            bb = max(alt)
    return bb


def fuse_params(params, num_heads):
    """One-time parameter preprocessing: QKV fusion + folding the query scale."""
    (wq_t, wk_t, wv_t, bq, bk, bv, wo_t, bo,
     ln1_w, ln1_b, wl_t, bl, ln2_w, ln2_b) = params
    E = wq_t.shape[0]
    scale = 1.0 / math.sqrt(E // num_heads)
    wqkv_t = jnp.concatenate([wq_t * scale, wk_t, wv_t], axis=1)   # (E, 3E)
    bqkv = jnp.concatenate([bq * scale, bk, bv], axis=1)           # (1, 3E)
    return (wqkv_t, bqkv, wo_t, bo, ln1_w, ln1_b, wl_t, bl, ln2_w, ln2_b)


def featureformer_forward(x, fused_params, num_heads, block_b=None):
    B, S, E = x.shape
    if block_b is None:
        block_b = _pick_block_b(B, S)
    assert B % block_b == 0

    kern = functools.partial(featureformer_kernel, num_heads)
    rep2d = lambda shape: pl.BlockSpec(shape, lambda b: (0, 0))

    in_specs = [
        pl.BlockSpec((block_b, S, E), lambda b: (b, 0, 0)),   # x
        rep2d((E, 3 * E)), rep2d((1, 3 * E)),                 # fused Wqkv_t, bqkv
        rep2d((E, E)), rep2d((1, E)),                         # Wo_t, bo
        rep2d((S, E)), rep2d((S, E)),                         # ln1 w, b
        rep2d((E, E)), rep2d((1, E)),                         # Wlin_t, blin
        rep2d((S, E)), rep2d((S, E)),                         # ln2 w, b
    ]

    # Per-step VMEM: double-buffered (block_b,S,E) in/out blocks + the small weight set +
    # one (block_b,S,E) f32 scratch -- far below the 16/32 MiB scoped defaults of
    # v5e/v6e/v7x at these shapes, so no vmem_limit_bytes override is needed.
    return pl.pallas_call(
        kern,
        out_shape=jax.ShapeDtypeStruct((B, S, E), x.dtype),
        grid_spec=pltpu.PrefetchScalarGridSpec(
            num_scalar_prefetch=0,
            grid=(B // block_b,),
            in_specs=in_specs,
            out_specs=pl.BlockSpec((block_b, S, E), lambda b: (b, 0, 0)),
            scratch_shapes=[pltpu.VMEM((block_b, S, E), jnp.float32)],
        ),
        compiler_params=pltpu.CompilerParams(dimension_semantics=("parallel",)),
    )(x, *fused_params)


def make_params(key, window_size, input_dim):
    ks = jax.random.split(key, 8)
    E, S = input_dim, window_size
    sc = 1.0 / math.sqrt(E)
    # nn.MultiheadAttention: in_proj_weight (3E, E), in_proj_bias (3E,), out_proj Linear(E, E)
    in_proj_w = jax.random.uniform(ks[0], (3 * E, E), jnp.float32, -sc, sc)
    in_proj_b = jax.random.uniform(ks[1], (3 * E,), jnp.float32, -sc, sc)
    wq_t = in_proj_w[0 * E:1 * E].T
    wk_t = in_proj_w[1 * E:2 * E].T
    wv_t = in_proj_w[2 * E:3 * E].T
    bq = in_proj_b[0 * E:1 * E].reshape(1, E)
    bk = in_proj_b[1 * E:2 * E].reshape(1, E)
    bv = in_proj_b[2 * E:3 * E].reshape(1, E)
    wo_t = jax.random.uniform(ks[2], (E, E), jnp.float32, -sc, sc).T
    bo = jax.random.uniform(ks[3], (1, E), jnp.float32, -sc, sc)
    # LayerNorm([S, E]) affine params
    ln1_w = jnp.ones((S, E), jnp.float32)
    ln1_b = jnp.zeros((S, E), jnp.float32)
    ln2_w = jnp.ones((S, E), jnp.float32)
    ln2_b = jnp.zeros((S, E), jnp.float32)
    # Linear(E, E)
    wl_t = jax.random.uniform(ks[4], (E, E), jnp.float32, -sc, sc).T
    bl = jax.random.uniform(ks[5], (1, E), jnp.float32, -sc, sc)
    return (wq_t, wk_t, wv_t, bq, bk, bv, wo_t, bo,
            ln1_w, ln1_b, wl_t, bl, ln2_w, ln2_b)


def reference_forward(x, params, num_heads):
    (wq_t, wk_t, wv_t, bq, bk, bv, wo_t, bo,
     ln1_w, ln1_b, wl_t, bl, ln2_w, ln2_b) = params
    B, S, E = x.shape
    Dh = E // num_heads

    def ln2d(h, w, b):
        mu = jnp.mean(h, axis=(-2, -1), keepdims=True)
        var = jnp.mean((h - mu) ** 2, axis=(-2, -1), keepdims=True)
        return (h - mu) / jnp.sqrt(var + LN_EPS) * w + b

    q = x @ wq_t + bq
    k = x @ wk_t + bk
    v = x @ wv_t + bv
    q = q.reshape(B, S, num_heads, Dh).transpose(0, 2, 1, 3)
    k = k.reshape(B, S, num_heads, Dh).transpose(0, 2, 1, 3)
    v = v.reshape(B, S, num_heads, Dh).transpose(0, 2, 1, 3)
    s = jnp.einsum("bhqd,bhkd->bhqk", q, k) / math.sqrt(Dh)
    p = jax.nn.softmax(s, axis=-1)
    a = jnp.einsum("bhqk,bhkd->bhqd", p, v).transpose(0, 2, 1, 3).reshape(B, S, E)
    attn_out = a @ wo_t + bo
    n1 = ln2d(x + attn_out, ln1_w, ln1_b)
    lin = n1 @ wl_t + bl
    return ln2d(n1 + lin, ln2_w, ln2_b)


if __name__ == "__main__":
    B, S, E, H = 2, 8, 32, 4   # batch, window_size, input_dim, heads
    key = jax.random.PRNGKey(0)
    kx, kp = jax.random.split(key)
    x = jax.random.normal(kx, (B, S, E), jnp.float32)
    params = make_params(kp, S, E)
    fused = fuse_params(params, H)        # one-time preprocessing (QKV fuse + scale fold)

    out = featureformer_forward(x, fused, H)
    out = jax.block_until_ready(out)

    ref = reference_forward(x, params, H)
    assert out.shape == (B, S, E)
    assert jnp.allclose(out, ref, atol=1e-4, rtol=1e-4), "mismatch vs JAX reference"
    print("KERNEL_OK")
</pallas_src>

<mosaic_0001>
module attributes {stable_mosaic.version = 11 : i64} {
  func.func @featureformer_kernel(%arg0: i32, %arg1: memref<2x8x32xf32, #tpu.memory_space<vmem>>, %arg2: memref<32x96xf32, #tpu.memory_space<vmem>>, %arg3: memref<1x96xf32, #tpu.memory_space<vmem>>, %arg4: memref<32x32xf32, #tpu.memory_space<vmem>>, %arg5: memref<1x32xf32, #tpu.memory_space<vmem>>, %arg6: memref<8x32xf32, #tpu.memory_space<vmem>>, %arg7: memref<8x32xf32, #tpu.memory_space<vmem>>, %arg8: memref<32x32xf32, #tpu.memory_space<vmem>>, %arg9: memref<1x32xf32, #tpu.memory_space<vmem>>, %arg10: memref<8x32xf32, #tpu.memory_space<vmem>>, %arg11: memref<8x32xf32, #tpu.memory_space<vmem>>, %arg12: memref<2x8x32xf32, #tpu.memory_space<vmem>>, %arg13: memref<2x8x32xf32, #tpu.memory_space<vmem>>) attributes {dimension_semantics = [#tpu.dimension_semantics<parallel>], iteration_bounds = array<i64: 1>, scalar_prefetch = 0 : i64, scratch_operands = 1 : i64, tpu.core_type = #tpu.core_type<tc>, window_params = [{transform_indices = @transform_0, window_bounds = array<i64: 2, 8, 32>}, {pipeline_mode = #tpu.pipeline_mode<synchronous>, transform_indices = @transform_1, window_bounds = array<i64: 32, 96>}, {pipeline_mode = #tpu.pipeline_mode<synchronous>, transform_indices = @transform_2, window_bounds = array<i64: 1, 96>}, {pipeline_mode = #tpu.pipeline_mode<synchronous>, transform_indices = @transform_3, window_bounds = array<i64: 32, 32>}, {pipeline_mode = #tpu.pipeline_mode<synchronous>, transform_indices = @transform_4, window_bounds = array<i64: 1, 32>}, {pipeline_mode = #tpu.pipeline_mode<synchronous>, transform_indices = @transform_5, window_bounds = array<i64: 8, 32>}, {pipeline_mode = #tpu.pipeline_mode<synchronous>, transform_indices = @transform_6, window_bounds = array<i64: 8, 32>}, {pipeline_mode = #tpu.pipeline_mode<synchronous>, transform_indices = @transform_7, window_bounds = array<i64: 32, 32>}, {pipeline_mode = #tpu.pipeline_mode<synchronous>, transform_indices = @transform_8, window_bounds = array<i64: 1, 32>}, {pipeline_mode = #tpu.pipeline_mode<synchronous>, transform_indices = @transform_9, window_bounds = array<i64: 8, 32>}, {pipeline_mode = #tpu.pipeline_mode<synchronous>, transform_indices = @transform_10, window_bounds = array<i64: 8, 32>}, {transform_indices = @transform_11, window_bounds = array<i64: 2, 8, 32>}]} {
    %c0 = arith.constant 0 : index
    %c0_0 = arith.constant 0 : index
    %c0_1 = arith.constant 0 : index
    %0 = vector.load %arg1[%c0, %c0_0, %c0_1] : memref<2x8x32xf32, #tpu.memory_space<vmem>>, vector<2x8x32xf32>
    %1 = vector.shape_cast %0 : vector<2x8x32xf32> to vector<16x32xf32>
    %c0_2 = arith.constant 0 : index
    %c0_3 = arith.constant 0 : index
    %2 = vector.load %arg2[%c0_2, %c0_3] : memref<32x96xf32, #tpu.memory_space<vmem>>, vector<32x96xf32>
    %cst = arith.constant dense<0.000000e+00> : vector<16x96xf32>
    %3 = tpu.matmul %1, %2, %cst {dimension_numbers = #tpu.dot_dimension_numbers<[1], [0], [0], [1], [0, 0, 1, 1], [], []>} : vector<16x32xf32>, vector<32x96xf32>, vector<16x96xf32> -> vector<16x96xf32>
    %c0_4 = arith.constant 0 : index
    %c0_5 = arith.constant 0 : index
    %4 = vector.load %arg3[%c0_4, %c0_5] : memref<1x96xf32, #tpu.memory_space<vmem>>, vector<1x96xf32>
    %5 = vector.broadcast %4 : vector<1x96xf32> to vector<16x96xf32>
    %6 = arith.addf %3, %5 : vector<16x96xf32>
    %7 = vector.extract_strided_slice %6 {offsets = [0, 0], sizes = [16, 32], strides = [1, 1]} : vector<16x96xf32> to vector<16x32xf32>
    %8 = vector.shape_cast %7 : vector<16x32xf32> to vector<2x8x32xf32>
    %9 = vector.extract_strided_slice %6 {offsets = [0, 32], sizes = [16, 32], strides = [1, 1]} : vector<16x96xf32> to vector<16x32xf32>
    %10 = vector.shape_cast %9 : vector<16x32xf32> to vector<2x8x32xf32>
    %11 = vector.extract_strided_slice %6 {offsets = [0, 64], sizes = [16, 32], strides = [1, 1]} : vector<16x96xf32> to vector<16x32xf32>
    %12 = vector.shape_cast %11 : vector<16x32xf32> to vector<2x8x32xf32>
    %13 = vector.extract_strided_slice %8 {offsets = [0, 0, 0], sizes = [2, 8, 8], strides = [1, 1, 1]} : vector<2x8x32xf32> to vector<2x8x8xf32>
    %14 = vector.extract_strided_slice %10 {offsets = [0, 0, 0], sizes = [2, 8, 8], strides = [1, 1, 1]} : vector<2x8x32xf32> to vector<2x8x8xf32>
    %15 = vector.extract_strided_slice %12 {offsets = [0, 0, 0], sizes = [2, 8, 8], strides = [1, 1, 1]} : vector<2x8x32xf32> to vector<2x8x8xf32>
    "tpu.trace_start"() <{level = 10 : i32, message = "bqd,bkd->bqk"}> : () -> ()
    %cst_6 = arith.constant dense<0.000000e+00> : vector<2x8x8xf32>
    %16 = tpu.matmul %13, %14, %cst_6 {dimension_numbers = #tpu.dot_dimension_numbers<[2], [2], [1], [1], [0, 0, 0, 1, 1, 1], [0], [0]>} : vector<2x8x8xf32>, vector<2x8x8xf32>, vector<2x8x8xf32> -> vector<2x8x8xf32>
    "tpu.trace_stop"() : () -> ()
    %cst_7 = arith.constant dense<0xFF800000> : vector<2x8xf32>
    %17 = vector.multi_reduction <maximumf>, %16, %cst_7 [2] : vector<2x8x8xf32> to vector<2x8xf32>
    %18 = vector.shape_cast %17 : vector<2x8xf32> to vector<2x8x1xf32>
    %19 = vector.broadcast %18 : vector<2x8x1xf32> to vector<2x8x8xf32>
    %20 = arith.subf %16, %19 : vector<2x8x8xf32>
    %21 = math.exp %20 : vector<2x8x8xf32>
    %cst_8 = arith.constant dense<0.000000e+00> : vector<2x8xf32>
    %22 = vector.multi_reduction <add>, %21, %cst_8 [2] : vector<2x8x8xf32> to vector<2x8xf32>
    %23 = vector.shape_cast %22 : vector<2x8xf32> to vector<2x8x1xf32>
    %24 = tpu.reciprocal %23 : vector<2x8x1xf32> -> vector<2x8x1xf32>
    %25 = vector.broadcast %24 : vector<2x8x1xf32> to vector<2x8x8xf32>
    %26 = arith.mulf %21, %25 : vector<2x8x8xf32>
    "tpu.trace_start"() <{level = 10 : i32, message = "bqk,bkd->bqd"}> : () -> ()
    %cst_9 = arith.constant dense<0.000000e+00> : vector<2x8x8xf32>
    %27 = tpu.matmul %26, %15, %cst_9 {dimension_numbers = #tpu.dot_dimension_numbers<[2], [1], [1], [2], [0, 0, 0, 1, 1, 2], [0], [0]>} : vector<2x8x8xf32>, vector<2x8x8xf32>, vector<2x8x8xf32> -> vector<2x8x8xf32>
    "tpu.trace_stop"() : () -> ()
    %c0_10 = arith.constant 0 : index
    %c0_11 = arith.constant 0 : index
    %c0_12 = arith.constant 0 : index
    %28 = vector.load %arg13[%c0_10, %c0_11, %c0_12] : memref<2x8x32xf32, #tpu.memory_space<vmem>>, vector<2x8x8xf32>
    tpu.vector_store %arg13[%c0_10, %c0_11, %c0_12], %27 {strides = array<i32>} : memref<2x8x32xf32, #tpu.memory_space<vmem>>, vector<2x8x8xf32>,
    %29 = vector.extract_strided_slice %8 {offsets = [0, 0, 8], sizes = [2, 8, 8], strides = [1, 1, 1]} : vector<2x8x32xf32> to vector<2x8x8xf32>
    %30 = vector.extract_strided_slice %10 {offsets = [0, 0, 8], sizes = [2, 8, 8], strides = [1, 1, 1]} : vector<2x8x32xf32> to vector<2x8x8xf32>
    %31 = vector.extract_strided_slice %12 {offsets = [0, 0, 8], sizes = [2, 8, 8], strides = [1, 1, 1]} : vector<2x8x32xf32> to vector<2x8x8xf32>
    "tpu.trace_start"() <{level = 10 : i32, message = "bqd,bkd->bqk"}> : () -> ()
    %cst_13 = arith.constant dense<0.000000e+00> : vector<2x8x8xf32>
    %32 = tpu.matmul %29, %30, %cst_13 {dimension_numbers = #tpu.dot_dimension_numbers<[2], [2], [1], [1], [0, 0, 0, 1, 1, 1], [0], [0]>} : vector<2x8x8xf32>, vector<2x8x8xf32>, vector<2x8x8xf32> -> vector<2x8x8xf32>
    "tpu.trace_stop"() : () -> ()
    %cst_14 = arith.constant dense<0xFF800000> : vector<2x8xf32>
    %33 = vector.multi_reduction <maximumf>, %32, %cst_14 [2] : vector<2x8x8xf32> to vector<2x8xf32>
    %34 = vector.shape_cast %33 : vector<2x8xf32> to vector<2x8x1xf32>
    %35 = vector.broadcast %34 : vector<2x8x1xf32> to vector<2x8x8xf32>
    %36 = arith.subf %32, %35 : vector<2x8x8xf32>
    %37 = math.exp %36 : vector<2x8x8xf32>
    %cst_15 = arith.constant dense<0.000000e+00> : vector<2x8xf32>
    %38 = vector.multi_reduction <add>, %37, %cst_15 [2] : vector<2x8x8xf32> to vector<2x8xf32>
    %39 = vector.shape_cast %38 : vector<2x8xf32> to vector<2x8x1xf32>
    %40 = tpu.reciprocal %39 : vector<2x8x1xf32> -> vector<2x8x1xf32>
    %41 = vector.broadcast %40 : vector<2x8x1xf32> to vector<2x8x8xf32>
    %42 = arith.mulf %37, %41 : vector<2x8x8xf32>
    "tpu.trace_start"() <{level = 10 : i32, message = "bqk,bkd->bqd"}> : () -> ()
    %cst_16 = arith.constant dense<0.000000e+00> : vector<2x8x8xf32>
    %43 = tpu.matmul %42, %31, %cst_16 {dimension_numbers = #tpu.dot_dimension_numbers<[2], [1], [1], [2], [0, 0, 0, 1, 1, 2], [0], [0]>} : vector<2x8x8xf32>, vector<2x8x8xf32>, vector<2x8x8xf32> -> vector<2x8x8xf32>
    "tpu.trace_stop"() : () -> ()
    %c0_17 = arith.constant 0 : index
    %c0_18 = arith.constant 0 : index
    %c8 = arith.constant 8 : index
    %44 = vector.load %arg13[%c0_17, %c0_18, %c8] : memref<2x8x32xf32, #tpu.memory_space<vmem>>, vector<2x8x8xf32>
    tpu.vector_store %arg13[%c0_17, %c0_18, %c8], %43 {strides = array<i32>} : memref<2x8x32xf32, #tpu.memory_space<vmem>>, vector<2x8x8xf32>,
    %45 = vector.extract_strided_slice %8 {offsets = [0, 0, 16], sizes = [2, 8, 8], strides = [1, 1, 1]} : vector<2x8x32xf32> to vector<2x8x8xf32>
    %46 = vector.extract_strided_slice %10 {offsets = [0, 0, 16], sizes = [2, 8, 8], strides = [1, 1, 1]} : vector<2x8x32xf32> to vector<2x8x8xf32>
    %47 = vector.extract_strided_slice %12 {offsets = [0, 0, 16], sizes = [2, 8, 8], strides = [1, 1, 1]} : vector<2x8x32xf32> to vector<2x8x8xf32>
    "tpu.trace_start"() <{level = 10 : i32, message = "bqd,bkd->bqk"}> : () -> ()
    %cst_19 = arith.constant dense<0.000000e+00> : vector<2x8x8xf32>
    %48 = tpu.matmul %45, %46, %cst_19 {dimension_numbers = #tpu.dot_dimension_numbers<[2], [2], [1], [1], [0, 0, 0, 1, 1, 1], [0], [0]>} : vector<2x8x8xf32>, vector<2x8x8xf32>, vector<2x8x8xf32> -> vector<2x8x8xf32>
    "tpu.trace_stop"() : () -> ()
    %cst_20 = arith.constant dense<0xFF800000> : vector<2x8xf32>
    %49 = vector.multi_reduction <maximumf>, %48, %cst_20 [2] : vector<2x8x8xf32> to vector<2x8xf32>
    %50 = vector.shape_cast %49 : vector<2x8xf32> to vector<2x8x1xf32>
    %51 = vector.broadcast %50 : vector<2x8x1xf32> to vector<2x8x8xf32>
    %52 = arith.subf %48, %51 : vector<2x8x8xf32>
    %53 = math.exp %52 : vector<2x8x8xf32>
    %cst_21 = arith.constant dense<0.000000e+00> : vector<2x8xf32>
    %54 = vector.multi_reduction <add>, %53, %cst_21 [2] : vector<2x8x8xf32> to vector<2x8xf32>
    %55 = vector.shape_cast %54 : vector<2x8xf32> to vector<2x8x1xf32>
    %56 = tpu.reciprocal %55 : vector<2x8x1xf32> -> vector<2x8x1xf32>
    %57 = vector.broadcast %56 : vector<2x8x1xf32> to vector<2x8x8xf32>
    %58 = arith.mulf %53, %57 : vector<2x8x8xf32>
    "tpu.trace_start"() <{level = 10 : i32, message = "bqk,bkd->bqd"}> : () -> ()
    %cst_22 = arith.constant dense<0.000000e+00> : vector<2x8x8xf32>
    %59 = tpu.matmul %58, %47, %cst_22 {dimension_numbers = #tpu.dot_dimension_numbers<[2], [1], [1], [2], [0, 0, 0, 1, 1, 2], [0], [0]>} : vector<2x8x8xf32>, vector<2x8x8xf32>, vector<2x8x8xf32> -> vector<2x8x8xf32>
    "tpu.trace_stop"() : () -> ()
    %c0_23 = arith.constant 0 : index
    %c0_24 = arith.constant 0 : index
    %c16 = arith.constant 16 : index
    %60 = vector.load %arg13[%c0_23, %c0_24, %c16] : memref<2x8x32xf32, #tpu.memory_space<vmem>>, vector<2x8x8xf32>
    tpu.vector_store %arg13[%c0_23, %c0_24, %c16], %59 {strides = array<i32>} : memref<2x8x32xf32, #tpu.memory_space<vmem>>, vector<2x8x8xf32>,
    %61 = vector.extract_strided_slice %8 {offsets = [0, 0, 24], sizes = [2, 8, 8], strides = [1, 1, 1]} : vector<2x8x32xf32> to vector<2x8x8xf32>
    %62 = vector.extract_strided_slice %10 {offsets = [0, 0, 24], sizes = [2, 8, 8], strides = [1, 1, 1]} : vector<2x8x32xf32> to vector<2x8x8xf32>
    %63 = vector.extract_strided_slice %12 {offsets = [0, 0, 24], sizes = [2, 8, 8], strides = [1, 1, 1]} : vector<2x8x32xf32> to vector<2x8x8xf32>
    "tpu.trace_start"() <{level = 10 : i32, message = "bqd,bkd->bqk"}> : () -> ()
    %cst_25 = arith.constant dense<0.000000e+00> : vector<2x8x8xf32>
    %64 = tpu.matmul %61, %62, %cst_25 {dimension_numbers = #tpu.dot_dimension_numbers<[2], [2], [1], [1], [0, 0, 0, 1, 1, 1], [0], [0]>} : vector<2x8x8xf32>, vector<2x8x8xf32>, vector<2x8x8xf32> -> vector<2x8x8xf32>
    "tpu.trace_stop"() : () -> ()
    %cst_26 = arith.constant dense<0xFF800000> : vector<2x8xf32>
    %65 = vector.multi_reduction <maximumf>, %64, %cst_26 [2] : vector<2x8x8xf32> to vector<2x8xf32>
    %66 = vector.shape_cast %65 : vector<2x8xf32> to vector<2x8x1xf32>
    %67 = vector.broadcast %66 : vector<2x8x1xf32> to vector<2x8x8xf32>
    %68 = arith.subf %64, %67 : vector<2x8x8xf32>
    %69 = math.exp %68 : vector<2x8x8xf32>
    %cst_27 = arith.constant dense<0.000000e+00> : vector<2x8xf32>
    %70 = vector.multi_reduction <add>, %69, %cst_27 [2] : vector<2x8x8xf32> to vector<2x8xf32>
    %71 = vector.shape_cast %70 : vector<2x8xf32> to vector<2x8x1xf32>
    %72 = tpu.reciprocal %71 : vector<2x8x1xf32> -> vector<2x8x1xf32>
    %73 = vector.broadcast %72 : vector<2x8x1xf32> to vector<2x8x8xf32>
    %74 = arith.mulf %69, %73 : vector<2x8x8xf32>
    "tpu.trace_start"() <{level = 10 : i32, message = "bqk,bkd->bqd"}> : () -> ()
    %cst_28 = arith.constant dense<0.000000e+00> : vector<2x8x8xf32>
    %75 = tpu.matmul %74, %63, %cst_28 {dimension_numbers = #tpu.dot_dimension_numbers<[2], [1], [1], [2], [0, 0, 0, 1, 1, 2], [0], [0]>} : vector<2x8x8xf32>, vector<2x8x8xf32>, vector<2x8x8xf32> -> vector<2x8x8xf32>
    "tpu.trace_stop"() : () -> ()
    %c0_29 = arith.constant 0 : index
    %c0_30 = arith.constant 0 : index
    %c24 = arith.constant 24 : index
    %76 = vector.load %arg13[%c0_29, %c0_30, %c24] : memref<2x8x32xf32, #tpu.memory_space<vmem>>, vector<2x8x8xf32>
    tpu.vector_store %arg13[%c0_29, %c0_30, %c24], %75 {strides = array<i32>} : memref<2x8x32xf32, #tpu.memory_space<vmem>>, vector<2x8x8xf32>,
    %c0_31 = arith.constant 0 : index
    %c0_32 = arith.constant 0 : index
    %c0_33 = arith.constant 0 : index
    %77 = vector.load %arg13[%c0_31, %c0_32, %c0_33] : memref<2x8x32xf32, #tpu.memory_space<vmem>>, vector<2x8x32xf32>
    %78 = vector.shape_cast %77 : vector<2x8x32xf32> to vector<16x32xf32>
    %c0_34 = arith.constant 0 : index
    %c0_35 = arith.constant 0 : index
    %79 = vector.load %arg4[%c0_34, %c0_35] : memref<32x32xf32, #tpu.memory_space<vmem>>, vector<32x32xf32>
    %cst_36 = arith.constant dense<0.000000e+00> : vector<16x32xf32>
    %80 = tpu.matmul %78, %79, %cst_36 {dimension_numbers = #tpu.dot_dimension_numbers<[1], [0], [0], [1], [0, 0, 1, 1], [], []>} : vector<16x32xf32>, vector<32x32xf32>, vector<16x32xf32> -> vector<16x32xf32>
    %c0_37 = arith.constant 0 : index
    %c0_38 = arith.constant 0 : index
    %81 = vector.load %arg5[%c0_37, %c0_38] : memref<1x32xf32, #tpu.memory_space<vmem>>, vector<1x32xf32>
    %82 = vector.broadcast %81 : vector<1x32xf32> to vector<16x32xf32>
    %83 = arith.addf %80, %82 : vector<16x32xf32>
    %84 = arith.addf %1, %83 : vector<16x32xf32>
    %85 = vector.shape_cast %84 : vector<16x32xf32> to vector<2x8x32xf32>
    %c0_39 = arith.constant 0 : index
    %c0_40 = arith.constant 0 : index
    %86 = vector.load %arg6[%c0_39, %c0_40] : memref<8x32xf32, #tpu.memory_space<vmem>>, vector<8x32xf32>
    %c0_41 = arith.constant 0 : index
    %c0_42 = arith.constant 0 : index
    %87 = vector.load %arg7[%c0_41, %c0_42] : memref<8x32xf32, #tpu.memory_space<vmem>>, vector<8x32xf32>
    %cst_43 = arith.constant dense<0.000000e+00> : vector<2x8xf32>
    %88 = vector.multi_reduction <add>, %85, %cst_43 [2] : vector<2x8x32xf32> to vector<2x8xf32>
    %89 = vector.shape_cast %88 : vector<2x8xf32> to vector<2x8x1xf32>
    %cst_44 = arith.constant dense<0.000000e+00> : vector<2x1xf32>
    %90 = vector.multi_reduction <add>, %89, %cst_44 [1] : vector<2x8x1xf32> to vector<2x1xf32>
    %91 = vector.shape_cast %90 : vector<2x1xf32> to vector<2x1x1xf32>
    %92 = arith.mulf %85, %85 : vector<2x8x32xf32>
    %cst_45 = arith.constant dense<0.000000e+00> : vector<2x8xf32>
    %93 = vector.multi_reduction <add>, %92, %cst_45 [2] : vector<2x8x32xf32> to vector<2x8xf32>
    %94 = vector.shape_cast %93 : vector<2x8xf32> to vector<2x8x1xf32>
    %cst_46 = arith.constant dense<0.000000e+00> : vector<2x1xf32>
    %95 = vector.multi_reduction <add>, %94, %cst_46 [1] : vector<2x8x1xf32> to vector<2x1xf32>
    %96 = vector.shape_cast %95 : vector<2x1xf32> to vector<2x1x1xf32>
    %cst_47 = arith.constant 3.906250e-03 : f32
    %97 = vector.broadcast %cst_47 : f32 to vector<2x1x1xf32>
    %98 = arith.mulf %91, %97 : vector<2x1x1xf32>
    %cst_48 = arith.constant 3.906250e-03 : f32
    %99 = vector.broadcast %cst_48 : f32 to vector<2x1x1xf32>
    %100 = arith.mulf %96, %99 : vector<2x1x1xf32>
    %101 = arith.mulf %98, %98 : vector<2x1x1xf32>
    %102 = arith.subf %100, %101 : vector<2x1x1xf32>
    %103 = vector.broadcast %98 : vector<2x1x1xf32> to vector<2x8x32xf32>
    %104 = arith.subf %85, %103 : vector<2x8x32xf32>
    %cst_49 = arith.constant 9.99999974E-6 : f32
    %105 = vector.broadcast %cst_49 : f32 to vector<2x1x1xf32>
    %106 = arith.addf %102, %105 : vector<2x1x1xf32>
    %107 = math.rsqrt %106 : vector<2x1x1xf32>
    %108 = vector.broadcast %107 : vector<2x1x1xf32> to vector<2x8x32xf32>
    %109 = arith.mulf %104, %108 : vector<2x8x32xf32>
    %110 = vector.shape_cast %86 : vector<8x32xf32> to vector<1x8x32xf32>
    %111 = vector.broadcast %110 : vector<1x8x32xf32> to vector<2x8x32xf32>
    %112 = arith.mulf %109, %111 : vector<2x8x32xf32>
    %113 = vector.shape_cast %87 : vector<8x32xf32> to vector<1x8x32xf32>
    %114 = vector.broadcast %113 : vector<1x8x32xf32> to vector<2x8x32xf32>
    %115 = arith.addf %112, %114 : vector<2x8x32xf32>
    %116 = vector.shape_cast %115 : vector<2x8x32xf32> to vector<16x32xf32>
    %c0_50 = arith.constant 0 : index
    %c0_51 = arith.constant 0 : index
    %117 = vector.load %arg8[%c0_50, %c0_51] : memref<32x32xf32, #tpu.memory_space<vmem>>, vector<32x32xf32>
    %cst_52 = arith.constant dense<0.000000e+00> : vector<16x32xf32>
    %118 = tpu.matmul %116, %117, %cst_52 {dimension_numbers = #tpu.dot_dimension_numbers<[1], [0], [0], [1], [0, 0, 1, 1], [], []>} : vector<16x32xf32>, vector<32x32xf32>, vector<16x32xf32> -> vector<16x32xf32>
    %c0_53 = arith.constant 0 : index
    %c0_54 = arith.constant 0 : index
    %119 = vector.load %arg9[%c0_53, %c0_54] : memref<1x32xf32, #tpu.memory_space<vmem>>, vector<1x32xf32>
    %120 = vector.broadcast %119 : vector<1x32xf32> to vector<16x32xf32>
    %121 = arith.addf %118, %120 : vector<16x32xf32>
    %122 = vector.shape_cast %121 : vector<16x32xf32> to vector<2x8x32xf32>
    %123 = arith.addf %115, %122 : vector<2x8x32xf32>
    %c0_55 = arith.constant 0 : index
    %c0_56 = arith.constant 0 : index
    %124 = vector.load %arg10[%c0_55, %c0_56] : memref<8x32xf32, #tpu.memory_space<vmem>>, vector<8x32xf32>
    %c0_57 = arith.constant 0 : index
    %c0_58 = arith.constant 0 : index
    %125 = vector.load %arg11[%c0_57, %c0_58] : memref<8x32xf32, #tpu.memory_space<vmem>>, vector<8x32xf32>
    %cst_59 = arith.constant dense<0.000000e+00> : vector<2x8xf32>
    %126 = vector.multi_reduction <add>, %123, %cst_59 [2] : vector<2x8x32xf32> to vector<2x8xf32>
    %127 = vector.shape_cast %126 : vector<2x8xf32> to vector<2x8x1xf32>
    %cst_60 = arith.constant dense<0.000000e+00> : vector<2x1xf32>
    %128 = vector.multi_reduction <add>, %127, %cst_60 [1] : vector<2x8x1xf32> to vector<2x1xf32>
    %129 = vector.shape_cast %128 : vector<2x1xf32> to vector<2x1x1xf32>
    %130 = arith.mulf %123, %123 : vector<2x8x32xf32>
    %cst_61 = arith.constant dense<0.000000e+00> : vector<2x8xf32>
    %131 = vector.multi_reduction <add>, %130, %cst_61 [2] : vector<2x8x32xf32> to vector<2x8xf32>
    %132 = vector.shape_cast %131 : vector<2x8xf32> to vector<2x8x1xf32>
    %cst_62 = arith.constant dense<0.000000e+00> : vector<2x1xf32>
    %133 = vector.multi_reduction <add>, %132, %cst_62 [1] : vector<2x8x1xf32> to vector<2x1xf32>
    %134 = vector.shape_cast %133 : vector<2x1xf32> to vector<2x1x1xf32>
    %cst_63 = arith.constant 3.906250e-03 : f32
    %135 = vector.broadcast %cst_63 : f32 to vector<2x1x1xf32>
    %136 = arith.mulf %129, %135 : vector<2x1x1xf32>
    %cst_64 = arith.constant 3.906250e-03 : f32
    %137 = vector.broadcast %cst_64 : f32 to vector<2x1x1xf32>
    %138 = arith.mulf %134, %137 : vector<2x1x1xf32>
    %139 = arith.mulf %136, %136 : vector<2x1x1xf32>
    %140 = arith.subf %138, %139 : vector<2x1x1xf32>
    %141 = vector.broadcast %136 : vector<2x1x1xf32> to vector<2x8x32xf32>
    %142 = arith.subf %123, %141 : vector<2x8x32xf32>
    %cst_65 = arith.constant 9.99999974E-6 : f32
    %143 = vector.broadcast %cst_65 : f32 to vector<2x1x1xf32>
    %144 = arith.addf %140, %143 : vector<2x1x1xf32>
    %145 = math.rsqrt %144 : vector<2x1x1xf32>
    %146 = vector.broadcast %145 : vector<2x1x1xf32> to vector<2x8x32xf32>
    %147 = arith.mulf %142, %146 : vector<2x8x32xf32>
    %148 = vector.shape_cast %124 : vector<8x32xf32> to vector<1x8x32xf32>
    %149 = vector.broadcast %148 : vector<1x8x32xf32> to vector<2x8x32xf32>
    %150 = arith.mulf %147, %149 : vector<2x8x32xf32>
    %151 = vector.shape_cast %125 : vector<8x32xf32> to vector<1x8x32xf32>
    %152 = vector.broadcast %151 : vector<1x8x32xf32> to vector<2x8x32xf32>
    %153 = arith.addf %150, %152 : vector<2x8x32xf32>
    %c0_66 = arith.constant 0 : index
    %c0_67 = arith.constant 0 : index
    %c0_68 = arith.constant 0 : index
    %154 = vector.load %arg12[%c0_66, %c0_67, %c0_68] : memref<2x8x32xf32, #tpu.memory_space<vmem>>, vector<2x8x32xf32>
    tpu.vector_store %arg12[%c0_66, %c0_67, %c0_68], %153 {strides = array<i32>} : memref<2x8x32xf32, #tpu.memory_space<vmem>>, vector<2x8x32xf32>,
    return
  }
  func.func @transform_0(%arg0: i32) -> (i32, i32, i32) {
    %c0_i32 = arith.constant 0 : i32
    %c0_i32_0 = arith.constant 0 : i32
    %c0_i32_1 = arith.constant 0 : i32
    return %arg0, %c0_i32, %c0_i32_0 : i32, i32, i32
  }
  func.func @transform_1(%arg0: i32) -> (i32, i32) {
    %c0_i32 = arith.constant 0 : i32
    %c0_i32_0 = arith.constant 0 : i32
    %c0_i32_1 = arith.constant 0 : i32
    return %c0_i32, %c0_i32_0 : i32, i32
  }
  func.func @transform_2(%arg0: i32) -> (i32, i32) {
    %c0_i32 = arith.constant 0 : i32
    %c0_i32_0 = arith.constant 0 : i32
    %c0_i32_1 = arith.constant 0 : i32
    return %c0_i32, %c0_i32_0 : i32, i32
  }
  func.func @transform_3(%arg0: i32) -> (i32, i32) {
    %c0_i32 = arith.constant 0 : i32
    %c0_i32_0 = arith.constant 0 : i32
    %c0_i32_1 = arith.constant 0 : i32
    return %c0_i32, %c0_i32_0 : i32, i32
  }
  func.func @transform_4(%arg0: i32) -> (i32, i32) {
    %c0_i32 = arith.constant 0 : i32
    %c0_i32_0 = arith.constant 0 : i32
    %c0_i32_1 = arith.constant 0 : i32
    return %c0_i32, %c0_i32_0 : i32, i32
  }
  func.func @transform_5(%arg0: i32) -> (i32, i32) {
    %c0_i32 = arith.constant 0 : i32
    %c0_i32_0 = arith.constant 0 : i32
    %c0_i32_1 = arith.constant 0 : i32
    return %c0_i32, %c0_i32_0 : i32, i32
  }
  func.func @transform_6(%arg0: i32) -> (i32, i32) {
    %c0_i32 = arith.constant 0 : i32
    %c0_i32_0 = arith.constant 0 : i32
    %c0_i32_1 = arith.constant 0 : i32
    return %c0_i32, %c0_i32_0 : i32, i32
  }
  func.func @transform_7(%arg0: i32) -> (i32, i32) {
    %c0_i32 = arith.constant 0 : i32
    %c0_i32_0 = arith.constant 0 : i32
    %c0_i32_1 = arith.constant 0 : i32
    return %c0_i32, %c0_i32_0 : i32, i32
  }
  func.func @transform_8(%arg0: i32) -> (i32, i32) {
    %c0_i32 = arith.constant 0 : i32
    %c0_i32_0 = arith.constant 0 : i32
    %c0_i32_1 = arith.constant 0 : i32
    return %c0_i32, %c0_i32_0 : i32, i32
  }
  func.func @transform_9(%arg0: i32) -> (i32, i32) {
    %c0_i32 = arith.constant 0 : i32
    %c0_i32_0 = arith.constant 0 : i32
    %c0_i32_1 = arith.constant 0 : i32
    return %c0_i32, %c0_i32_0 : i32, i32
  }
  func.func @transform_10(%arg0: i32) -> (i32, i32) {
    %c0_i32 = arith.constant 0 : i32
    %c0_i32_0 = arith.constant 0 : i32
    %c0_i32_1 = arith.constant 0 : i32
    return %c0_i32, %c0_i32_0 : i32, i32
  }
  func.func @transform_11(%arg0: i32) -> (i32, i32, i32) {
    %c0_i32 = arith.constant 0 : i32
    %c0_i32_0 = arith.constant 0 : i32
    %c0_i32_1 = arith.constant 0 : i32
    return %arg0, %c0_i32, %c0_i32_0 : i32, i32, i32
  }
}

</mosaic_0001>

<llo_original>
// kernel: tpu_custom_call.1
$region0: #{tpu_custom_call.1}
  #allocation0 [shape = 'u32[]', space=smem, size = 0x4, offset = 0x4, fixed_abs, tag = 'smem constant byte address 0x4 - core index']
  #allocation1 [shape = 'u32[144,128]{1,0:T(1,128)}', space=vmem, size = 0x12000, scoped, tag = 'internal scratch']
  #allocation2 [shape = 'f32[2,8,32]{2,1,0:T(8,128)}', space=vmem, size = 0x2000, scoped, tag = 'scratch operand']
  %s0 = inlined_call_operand.hbm [shape: f32[2,8,32], index: 0, kind: input, shape index: {}]
  %s1 = inlined_call_operand.hbm [shape: f32[32,96], index: 1, kind: input, shape index: {}]
  %s2 = inlined_call_operand.vmem [shape: f32[1,96], index: 2, kind: input, shape index: {}]
  %s3 = inlined_call_operand.hbm [shape: f32[32,32], index: 3, kind: input, shape index: {}]
  %s4 = inlined_call_operand.vmem [shape: f32[1,32], index: 4, kind: input, shape index: {}]
  %s5 = inlined_call_operand.vmem [shape: f32[8,32], index: 5, kind: input, shape index: {}]
  %s6 = inlined_call_operand.vmem [shape: f32[8,32], index: 6, kind: input, shape index: {}]
  %s7 = inlined_call_operand.hbm [shape: f32[32,32], index: 7, kind: input, shape index: {}]
  %s8 = inlined_call_operand.hbm [shape: f32[1,32], index: 8, kind: input, shape index: {}]
  %s9 = inlined_call_operand.vmem [shape: f32[8,32], index: 9, kind: input, shape index: {}]
  %s10 = inlined_call_operand.vmem [shape: f32[8,32], index: 10, kind: input, shape index: {}]
  %s11 = inlined_call_operand.hbm [shape: f32[2,8,32], index: 11, kind: output, shape index: {}]
  %s12 = sld [smem:[#allocation0]]
  $region74: #{tpu_custom_call.1} parent=0
    _
  %s14 = ssub.s32 1, %s12
  %s15 = scalar_select 0, %s14, %s12
  $region1: #{tpu_custom_call.1} parent=0
    #allocation3 [shape = 'u8[8192]{0}', space=vmem, size = 0x2000, scoped, tag = 'input window, operand 0, single buffered']
    #allocation4 [shape = 's32[1]{0}', space=sflag, size = 0x4, scoped, tag = 'scoped memory for tpu_custom_call.1']
    #allocation5 [shape = 's32[1]{0}', space=sflag, size = 0x4, scoped, tag = 'scoped memory for tpu_custom_call.1']
    #allocation6 [shape = 'u8[16384]{0}', space=vmem, size = 0x4000, scoped, tag = 'input window, operand 1, single buffered']
    #allocation7 [shape = 's32[1]{0}', space=sflag, size = 0x4, scoped, tag = 'scoped memory for tpu_custom_call.1']
    #allocation8 [shape = 'u8[16384]{0}', space=vmem, size = 0x4000, scoped, tag = 'input window, operand 3, single buffered']
    #allocation9 [shape = 'u8[16384]{0}', space=vmem, size = 0x4000, scoped, tag = 'input window, operand 7, single buffered']
    #allocation10 [shape = 's32[1]{0}', space=sflag, size = 0x4, scoped, tag = 'scoped memory for tpu_custom_call.1']
    #allocation11 [shape = 'u8[512]{0}', space=vmem, size = 0x400, scoped, tag = 'input window, operand 8, single buffered']
    #allocation12 [shape = 'u8[8192]{0}', space=vmem, size = 0x2000, scoped, tag = 'output window, operand 0, single buffered']
    %16 = vsyncpa [#allocation4], 0
    %17 = vsyncpa [#allocation7], 0
    %18 = vsyncpa [#allocation10], 0
    %19 = vsyncpa [#allocation5], 0
    // Predicated region
    $region2: #{tpu_custom_call.1} parent=1 // pred_check
      _
    $region3: #{tpu_custom_call.1} parent=1 // pred_check_branch
      %21 = sbr.rel (0) target = $region5
    $region4: #{tpu_custom_call.1} parent=1 // pred_region
      %s23 = ssub.s32 256, 256
      %24 = vsyncadd [#allocation4], %s23
      %s25 = sshll.u32 [#allocation3], 4
      %s26 = int_to_ptr.vmem [resolvable:$true] %s25
      %31 = dma.hbm_to_vmem [thread:$0]  %s0, 256, %s26, [#allocation4], 128, 128, 8
    $region5: #{tpu_custom_call.1} parent=1 // pred_fallthru
      _
    // Predicated region
    $region6: #{tpu_custom_call.1} parent=1 // pred_check
      _
    $region7: #{tpu_custom_call.1} parent=1 // pred_check_branch
      %33 = sbr.rel (0) target = $region9
    $region8: #{tpu_custom_call.1} parent=1 // pred_region
      %s35 = ssub.s32 512, 512
      %36 = vsyncadd [#allocation7], %s35
      %s37 = sshll.u32 [#allocation6], 4
      %s38 = int_to_ptr.vmem [resolvable:$true] %s37
      %43 = dma.hbm_to_vmem [thread:$0]  %s1, 512, %s38, [#allocation7], 128, 128, 8
    $region9: #{tpu_custom_call.1} parent=1 // pred_fallthru
      _
    // Predicated region
    $region10: #{tpu_custom_call.1} parent=1 // pred_check
      _
    $region11: #{tpu_custom_call.1} parent=1 // pred_check_branch
      %45 = sbr.rel (0) target = $region13
    $region12: #{tpu_custom_call.1} parent=1 // pred_region
      _
    $region13: #{tpu_custom_call.1} parent=1 // pred_fallthru
      _
    // Predicated region
    $region14: #{tpu_custom_call.1} parent=1 // pred_check
      _
    $region15: #{tpu_custom_call.1} parent=1 // pred_check_branch
      %47 = sbr.rel (0) target = $region17
    $region16: #{tpu_custom_call.1} parent=1 // pred_region
      %s49 = ssub.s32 512, 512
      %50 = vsyncadd [#allocation7], %s49
      %s51 = sshll.u32 [#allocation8], 4
      %s52 = int_to_ptr.vmem [resolvable:$true] %s51
      %57 = dma.hbm_to_vmem [thread:$0]  %s3, 512, %s52, [#allocation7], 128, 128, 8
    $region17: #{tpu_custom_call.1} parent=1 // pred_fallthru
      _
    // Predicated region
    $region18: #{tpu_custom_call.1} parent=1 // pred_check
      _
    $region19: #{tpu_custom_call.1} parent=1 // pred_check_branch
      %59 = sbr.rel (0) target = $region21
    $region20: #{tpu_custom_call.1} parent=1 // pred_region
      _
    $region21: #{tpu_custom_call.1} parent=1 // pred_fallthru
      _
    // Predicated region
    $region22: #{tpu_custom_call.1} parent=1 // pred_check
      _
    $region23: #{tpu_custom_call.1} parent=1 // pred_check_branch
      %61 = sbr.rel (0) target = $region25
    $region24: #{tpu_custom_call.1} parent=1 // pred_region
      _
    $region25: #{tpu_custom_call.1} parent=1 // pred_fallthru
      _
    // Predicated region
    $region26: #{tpu_custom_call.1} parent=1 // pred_check
      _
    $region27: #{tpu_custom_call.1} parent=1 // pred_check_branch
      %63 = sbr.rel (0) target = $region29
    $region28: #{tpu_custom_call.1} parent=1 // pred_region
      _
    $region29: #{tpu_custom_call.1} parent=1 // pred_fallthru
      _
    // Predicated region
    $region30: #{tpu_custom_call.1} parent=1 // pred_check
      _
    $region31: #{tpu_custom_call.1} parent=1 // pred_check_branch
      %65 = sbr.rel (0) target = $region33
    $region32: #{tpu_custom_call.1} parent=1 // pred_region
      %s67 = ssub.s32 512, 512
      %68 = vsyncadd [#allocation10], %s67
      %s69 = sshll.u32 [#allocation9], 4
      %s70 = int_to_ptr.vmem [resolvable:$true] %s69
      %75 = dma.hbm_to_vmem [thread:$0]  %s7, 512, %s70, [#allocation10], 128, 128, 8
    $region33: #{tpu_custom_call.1} parent=1 // pred_fallthru
      _
    // Predicated region
    $region34: #{tpu_custom_call.1} parent=1 // pred_check
      _
    $region35: #{tpu_custom_call.1} parent=1 // pred_check_branch
      %77 = sbr.rel (0) target = $region37
    $region36: #{tpu_custom_call.1} parent=1 // pred_region
      %s79 = ssub.s32 16, 16
      %80 = vsyncadd [#allocation10], %s79
      %s82 = sshll.u32 [#allocation11], 4
      %s83 = int_to_ptr.vmem [resolvable:$true] %s82
      %85 = dma.hbm_to_vmem [thread:$0]  %s8, 16, %s83, [#allocation10]
    $region37: #{tpu_custom_call.1} parent=1 // pred_fallthru
      _
    // Predicated region
    $region38: #{tpu_custom_call.1} parent=1 // pred_check
      _
    $region39: #{tpu_custom_call.1} parent=1 // pred_check_branch
      %87 = sbr.rel (0) target = $region41
    $region40: #{tpu_custom_call.1} parent=1 // pred_region
      _
    $region41: #{tpu_custom_call.1} parent=1 // pred_fallthru
      _
    // Predicated region
    $region42: #{tpu_custom_call.1} parent=1 // pred_check
      _
    $region43: #{tpu_custom_call.1} parent=1 // pred_check_branch
      %89 = sbr.rel (0) target = $region45
    $region44: #{tpu_custom_call.1} parent=1 // pred_region
      _
    $region45: #{tpu_custom_call.1} parent=1 // pred_fallthru
      _
    // Predicated region
    $region46: #{tpu_custom_call.1} parent=1 // pred_check
      _
    $region47: #{tpu_custom_call.1} parent=1 // pred_check_branch
      %91 = sbr.rel (0) target = $region49
    $region48: #{tpu_custom_call.1} parent=1 // pred_region
      %92 = dma.done [#allocation4], 256
    $region49: #{tpu_custom_call.1} parent=1 // pred_fallthru
      _
    // Predicated region
    $region50: #{tpu_custom_call.1} parent=1 // pred_check
      _
    $region51: #{tpu_custom_call.1} parent=1 // pred_check_branch
      %94 = sbr.rel (0) target = $region53
    $region52: #{tpu_custom_call.1} parent=1 // pred_region
      %95 = dma.done [#allocation7], 512
    $region53: #{tpu_custom_call.1} parent=1 // pred_fallthru
      _
    // Predicated region
    $region54: #{tpu_custom_call.1} parent=1 // pred_check
      _
    $region55: #{tpu_custom_call.1} parent=1 // pred_check_branch
      %97 = sbr.rel (0) target = $region57
    $region56: #{tpu_custom_call.1} parent=1 // pred_region
      %98 = dma.done [#allocation7], 512
    $region57: #{tpu_custom_call.1} parent=1 // pred_fallthru
      _
    // Predicated region
    $region58: #{tpu_custom_call.1} parent=1 // pred_check
      _
    $region59: #{tpu_custom_call.1} parent=1 // pred_check_branch
      %100 = sbr.rel (0) target = $region61
    $region60: #{tpu_custom_call.1} parent=1 // pred_region
      %101 = dma.done [#allocation10], 512
    $region61: #{tpu_custom_call.1} parent=1 // pred_fallthru
      _
    // Predicated region
    $region62: #{tpu_custom_call.1} parent=1 // pred_check
      _
    $region63: #{tpu_custom_call.1} parent=1 // pred_check_branch
      %103 = sbr.rel (0) target = $region65
    $region64: #{tpu_custom_call.1} parent=1 // pred_region
      %104 = dma.done [#allocation10], 16
    $region65: #{tpu_custom_call.1} parent=1 // pred_fallthru
      _
    %v105 = vld [vmem:[#allocation3] sm:$0xff]
    %v106 = vld [vmem:[#allocation3 + $0x8] sm:$0xff]
    %v107 = vld [vmem:[#allocation6] sm:$0xff]
    %v108 = vld [vmem:[#allocation6 + $0x8] sm:$0xff]
    %v109 = vld [vmem:[#allocation6 + $0x10] sm:$0xff]
    %v110 = vld [vmem:[#allocation6 + $0x18] sm:$0xff]
    %v111 = vld [vmem:[%s2] sm:$0x1]
    %v113 = vlaneseq
    %v114 = vshrl.u32 %v113, 7
    %v115 = vsub.s32 0, %v114
    %v116 = vrot.slane %v111, %v115
    %vm118 = vcmask 261120
    %v120 = vsel %vm118, %v105, 0
    %v123 = vsel %vm118, %v106, 0
    %125 = vmatprep.subr.mxu0 0.0
    %126 = vmatpush1.msra.mxu0 %v107
    %127 = vmatprep.subr.mxu0 0.0
    %128 = vmatpush1.msra.mxu0 %v108
    %129 = vmatprep.subr.mxu0 0.0
    %130 = vmatpush1.msra.mxu0 %v109
    %131 = vmatprep.subr.mxu0 0.0
    %132 = vmatpush1.msra.mxu0 %v110
    %133 = vmatprep.subr.mxu0 0.0
    %134 = vmatpush1.msra.mxu0 0.0
    %135 = vmatprep.subr.mxu0 0.0
    %136 = vmatpush1.msra.mxu0 0.0
    %137 = vmatprep.subr.mxu0 0.0
    %138 = vmatpush1.msra.mxu0 0.0
    %139 = vmatprep.subr.mxu0 0.0
    %140 = vmatpush1.msra.mxu0 0.0
    %141 = vmatprep.subr.mxu0 0.0
    %142 = vmatpush1.msra.mxu0 0.0
    %143 = vmatprep.subr.mxu0 0.0
    %144 = vmatpush1.msra.mxu0 0.0
    %145 = vmatprep.subr.mxu0 0.0
    %146 = vmatpush1.msra.mxu0 0.0
    %147 = vmatprep.subr.mxu0 0.0
    %148 = vmatpush1.msra.mxu0 0.0
    %149 = vmatprep.subr.mxu0 0.0
    %150 = vmatpush1.msra.mxu0 0.0
    %151 = vmatprep.subr.mxu0 0.0
    %152 = vmatpush1.msra.mxu0 0.0
    %153 = vmatprep.subr.mxu0 0.0
    %154 = vmatpush1.msra.mxu0 0.0
    %155 = vmatprep.subr.mxu0 0.0
    %156 = vmatpush1.msra.mxu0 0.0
    %157 = vmatprep.subr.mxu0 0.0
    %158 = vmatpush1.msra.mxu0 0.0
    %159 = vmatprep.subr.mxu0 0.0
    %160 = vmatpush1.msra.mxu0 0.0
    %161 = vmatprep.subr.mxu0 0.0
    %162 = vmatpush1.msra.mxu0 0.0
    %163 = vmatprep.subr.mxu0 0.0
    %164 = vmatpush1.msra.mxu0 0.0
    %165 = vmatprep.subr.mxu0 0.0
    %166 = vmatpush1.msra.mxu0 0.0
    %167 = vmatprep.subr.mxu0 0.0
    %168 = vmatpush1.msra.mxu0 0.0
    %169 = vmatprep.subr.mxu0 0.0
    %170 = vmatpush1.msra.mxu0 0.0
    %171 = vmatprep.subr.mxu0 0.0
    %172 = vmatpush1.msra.mxu0 0.0
    %173 = vmatprep.subr.mxu0 0.0
    %174 = vmatpush1.msra.mxu0 0.0
    %175 = vmatprep.subr.mxu0 0.0
    %176 = vmatpush1.msra.mxu0 0.0
    %177 = vmatprep.subr.mxu0 0.0
    %178 = vmatpush1.msra.mxu0 0.0
    %179 = vmatprep.subr.mxu0 0.0
    %180 = vmatpush1.msra.mxu0 0.0
    %181 = vmatprep.subr.mxu0 0.0
    %182 = vmatpush1.msra.mxu0 0.0
    %183 = vmatprep.subr.mxu0 0.0
    %184 = vmatpush1.msra.mxu0 0.0
    %185 = vmatprep.subr.mxu0 0.0
    %186 = vmatpush1.msra.mxu0 0.0
    %187 = vmatprep.subr.mxu0 0.0
    %188 = vmatpush1.msra.mxu0 0.0
    %189 = vmatprep.mubr.f32.mxu0 0.0
    %190 = vmatmul.mubr.f32.gmra.mrb[0].mxu0 %v120
    %v191 = vpop.f32.mrb[0].mxu0
    %v192 = vadd.f32 %v116, %v191
    %v193 = vpop.f32.mrb[0].mxu0
    %194 = vmatprep.mubr.f32.mxu0 0.0
    %195 = vmatmul.mubr.f32.gmra.mrb[0].mxu0 %v123
    %v196 = vpop.f32.mrb[0].mxu0
    %v197 = vadd.f32 %v116, %v196
    %v198 = vpop.f32.mrb[0].mxu0
    %199 = vdwg.mxu0
    %201 = vrot.lane.b32.xlu0 %v192, 96
    %v202 = vpop.permute.xlu0 %201
    %vm203 = vcmask 64512
    %v204 = vsel %vm203, %v192, 0
    %v206 = vsel %vm203, %v202, 0
    %208 = vmatprep.subr.mxu0 0.0
    %209 = vmatpush1.xpose.msra.mxu0 %v206
    %210 = vmatprep.subr.mxu0 0.0
    %211 = vmatpush1.xpose.msra.mxu0 0.0
    %212 = vmatprep.subr.mxu0 0.0
    %213 = vmatpush1.xpose.msra.mxu0 0.0
    %214 = vmatprep.subr.mxu0 0.0
    %215 = vmatpush1.xpose.msra.mxu0 0.0
    %216 = vmatprep.subr.mxu0 0.0
    %217 = vmatpush1.xpose.msra.mxu0 0.0
    %218 = vmatprep.subr.mxu0 0.0
    %219 = vmatpush1.xpose.msra.mxu0 0.0
    %220 = vmatprep.subr.mxu0 0.0
    %221 = vmatpush1.xpose.msra.mxu0 0.0
    %222 = vmatprep.subr.mxu0 0.0
    %223 = vmatpush1.xpose.msra.mxu0 0.0
    %224 = vmatprep.subr.mxu0 0.0
    %225 = vmatpush1.xpose.msra.mxu0 0.0
    %226 = vmatprep.subr.mxu0 0.0
    %227 = vmatpush1.xpose.msra.mxu0 0.0
    %228 = vmatprep.subr.mxu0 0.0
    %229 = vmatpush1.xpose.msra.mxu0 0.0
    %230 = vmatprep.subr.mxu0 0.0
    %231 = vmatpush1.xpose.msra.mxu0 0.0
    %232 = vmatprep.subr.mxu0 0.0
    %233 = vmatpush1.xpose.msra.mxu0 0.0
    %234 = vmatprep.subr.mxu0 0.0
    %235 = vmatpush1.xpose.msra.mxu0 0.0
    %236 = vmatprep.subr.mxu0 0.0
    %237 = vmatpush1.xpose.msra.mxu0 0.0
    %238 = vmatprep.subr.mxu0 0.0
    %239 = vmatpush1.xpose.msra.mxu0 0.0
    %240 = vmatprep.subr.mxu0 0.0
    %241 = vmatpush1.xpose.msra.mxu0 0.0
    %242 = vmatprep.subr.mxu0 0.0
    %243 = vmatpush1.xpose.msra.mxu0 0.0
    %244 = vmatprep.subr.mxu0 0.0
    %245 = vmatpush1.xpose.msra.mxu0 0.0
    %246 = vmatprep.subr.mxu0 0.0
    %247 = vmatpush1.xpose.msra.mxu0 0.0
    %248 = vmatprep.subr.mxu0 0.0
    %249 = vmatpush1.xpose.msra.mxu0 0.0
    %250 = vmatprep.subr.mxu0 0.0
    %251 = vmatpush1.xpose.msra.mxu0 0.0
    %252 = vmatprep.subr.mxu0 0.0
    %253 = vmatpush1.xpose.msra.mxu0 0.0
    %254 = vmatprep.subr.mxu0 0.0
    %255 = vmatpush1.xpose.msra.mxu0 0.0
    %256 = vmatprep.subr.mxu0 0.0
    %257 = vmatpush1.xpose.msra.mxu0 0.0
    %258 = vmatprep.subr.mxu0 0.0
    %259 = vmatpush1.xpose.msra.mxu0 0.0
    %260 = vmatprep.subr.mxu0 0.0
    %261 = vmatpush1.xpose.msra.mxu0 0.0
    %262 = vmatprep.subr.mxu0 0.0
    %263 = vmatpush1.xpose.msra.mxu0 0.0
    %264 = vmatprep.subr.mxu0 0.0
    %265 = vmatpush1.xpose.msra.mxu0 0.0
    %266 = vmatprep.subr.mxu0 0.0
    %267 = vmatpush1.xpose.msra.mxu0 0.0
    %268 = vmatprep.subr.mxu0 0.0
    %269 = vmatpush1.xpose.msra.mxu0 0.0
    %270 = vmatprep.subr.mxu0 0.0
    %271 = vmatpush1.xpose.msra.mxu0 0.0
    %272 = vmatprep.mubr.f32.mxu0 0.0
    %273 = vmatmul.mubr.f32.gmra.mrb[0].mxu0 %v204
    %v274 = vpop.f32.mrb[0].mxu0
    %v275 = vadd.f32 0.0, %v274
    %v276 = vpop.f32.mrb[0].mxu0
    %277 = vdwg.mxu0
    %279 = vrot.lane.b32.xlu0 %v197, 96
    %v280 = vpop.permute.xlu0 %279
    %v281 = vsel %vm203, %v197, 0
    %v283 = vsel %vm203, %v280, 0
    %285 = vmatprep.subr.mxu0 0.0
    %286 = vmatpush1.xpose.msra.mxu0 %v283
    %287 = vmatprep.subr.mxu0 0.0
    %288 = vmatpush1.xpose.msra.mxu0 0.0
    %289 = vmatprep.subr.mxu0 0.0
    %290 = vmatpush1.xpose.msra.mxu0 0.0
    %291 = vmatprep.subr.mxu0 0.0
    %292 = vmatpush1.xpose.msra.mxu0 0.0
    %293 = vmatprep.subr.mxu0 0.0
    %294 = vmatpush1.xpose.msra.mxu0 0.0
    %295 = vmatprep.subr.mxu0 0.0
    %296 = vmatpush1.xpose.msra.mxu0 0.0
    %297 = vmatprep.subr.mxu0 0.0
    %298 = vmatpush1.xpose.msra.mxu0 0.0
    %299 = vmatprep.subr.mxu0 0.0
    %300 = vmatpush1.xpose.msra.mxu0 0.0
    %301 = vmatprep.subr.mxu0 0.0
    %302 = vmatpush1.xpose.msra.mxu0 0.0
    %303 = vmatprep.subr.mxu0 0.0
    %304 = vmatpush1.xpose.msra.mxu0 0.0
    %305 = vmatprep.subr.mxu0 0.0
    %306 = vmatpush1.xpose.msra.mxu0 0.0
    %307 = vmatprep.subr.mxu0 0.0
    %308 = vmatpush1.xpose.msra.mxu0 0.0
    %309 = vmatprep.subr.mxu0 0.0
    %310 = vmatpush1.xpose.msra.mxu0 0.0
    %311 = vmatprep.subr.mxu0 0.0
    %312 = vmatpush1.xpose.msra.mxu0 0.0
    %313 = vmatprep.subr.mxu0 0.0
    %314 = vmatpush1.xpose.msra.mxu0 0.0
    %315 = vmatprep.subr.mxu0 0.0
    %316 = vmatpush1.xpose.msra.mxu0 0.0
    %317 = vmatprep.subr.mxu0 0.0
    %318 = vmatpush1.xpose.msra.mxu0 0.0
    %319 = vmatprep.subr.mxu0 0.0
    %320 = vmatpush1.xpose.msra.mxu0 0.0
    %321 = vmatprep.subr.mxu0 0.0
    %322 = vmatpush1.xpose.msra.mxu0 0.0
    %323 = vmatprep.subr.mxu0 0.0
    %324 = vmatpush1.xpose.msra.mxu0 0.0
    %325 = vmatprep.subr.mxu0 0.0
    %326 = vmatpush1.xpose.msra.mxu0 0.0
    %327 = vmatprep.subr.mxu0 0.0
    %328 = vmatpush1.xpose.msra.mxu0 0.0
    %329 = vmatprep.subr.mxu0 0.0
    %330 = vmatpush1.xpose.msra.mxu0 0.0
    %331 = vmatprep.subr.mxu0 0.0
    %332 = vmatpush1.xpose.msra.mxu0 0.0
    %333 = vmatprep.subr.mxu0 0.0
    %334 = vmatpush1.xpose.msra.mxu0 0.0
    %335 = vmatprep.subr.mxu0 0.0
    %336 = vmatpush1.xpose.msra.mxu0 0.0
    %337 = vmatprep.subr.mxu0 0.0
    %338 = vmatpush1.xpose.msra.mxu0 0.0
    %339 = vmatprep.subr.mxu0 0.0
    %340 = vmatpush1.xpose.msra.mxu0 0.0
    %341 = vmatprep.subr.mxu0 0.0
    %342 = vmatpush1.xpose.msra.mxu0 0.0
    %343 = vmatprep.subr.mxu0 0.0
    %344 = vmatpush1.xpose.msra.mxu0 0.0
    %345 = vmatprep.subr.mxu0 0.0
    %346 = vmatpush1.xpose.msra.mxu0 0.0
    %347 = vmatprep.subr.mxu0 0.0
    %348 = vmatpush1.xpose.msra.mxu0 0.0
    %349 = vmatprep.mubr.f32.mxu0 0.0
    %350 = vmatmul.mubr.f32.gmra.mrb[0].mxu0 %v281
    %v351 = vpop.f32.mrb[0].mxu0
    %v352 = vadd.f32 0.0, %v351
    %v353 = vpop.f32.mrb[0].mxu0
    %354 = vdwg.mxu0
    %v355 = vsel %vm203, %v275, -inf
    %356 = vmax.xlane.f32.xlu0 %v355
    %v357 = vpop.xlane.xlu0 %356
    %v358 = vsel %vm203, %v352, -inf
    %359 = vmax.xlane.f32.xlu0 %v358
    %v360 = vpop.xlane.xlu0 %359
    %v361 = vsub.f32 %v275, %v357
    %v362 = vsub.f32 %v352, %v360
    %v363 = vmul.f32 %v361, 1.442695
    %v364 = vpow.pop %v363
    %v365 = vmul.f32 %v362, 1.442695
    %v366 = vpow.pop %v365
    %v367 = vsel %vm203, %v364, 0.0
    %368 = vadd.xlane.f32.xlu0 %v367
    %v369 = vpop.xlane.xlu0 %368
    %v370 = vsel %vm203, %v366, 0.0
    %371 = vadd.xlane.f32.xlu0 %v370
    %v372 = vpop.xlane.xlu0 %371
    %v373 = vrcp.pop %v369
    %v374 = vrcp.pop %v372
    %v375 = vmul.f32 %v364, %v373
    %v376 = vmul.f32 %v366, %v374
    %377 = vrot.lane.b32.xlu0 %v192, 64
    %v378 = vpop.permute.xlu0 %377
    %v381 = vsel %vm203, %v375, 0
    %383 = vmatprep.subr.mxu0 0.0
    %384 = vmatpush1.msra.mxu0 %v378
    %385 = vmatprep.subr.mxu0 0.0
    %386 = vmatpush1.msra.mxu0 0.0
    %387 = vmatprep.subr.mxu0 0.0
    %388 = vmatpush1.msra.mxu0 0.0
    %389 = vmatprep.subr.mxu0 0.0
    %390 = vmatpush1.msra.mxu0 0.0
    %391 = vmatprep.subr.mxu0 0.0
    %392 = vmatpush1.msra.mxu0 0.0
    %393 = vmatprep.subr.mxu0 0.0
    %394 = vmatpush1.msra.mxu0 0.0
    %395 = vmatprep.subr.mxu0 0.0
    %396 = vmatpush1.msra.mxu0 0.0
    %397 = vmatprep.subr.mxu0 0.0
    %398 = vmatpush1.msra.mxu0 0.0
    %399 = vmatprep.subr.mxu0 0.0
    %400 = vmatpush1.msra.mxu0 0.0
    %401 = vmatprep.subr.mxu0 0.0
    %402 = vmatpush1.msra.mxu0 0.0
    %403 = vmatprep.subr.mxu0 0.0
    %404 = vmatpush1.msra.mxu0 0.0
    %405 = vmatprep.subr.mxu0 0.0
    %406 = vmatpush1.msra.mxu0 0.0
    %407 = vmatprep.subr.mxu0 0.0
    %408 = vmatpush1.msra.mxu0 0.0
    %409 = vmatprep.subr.mxu0 0.0
    %410 = vmatpush1.msra.mxu0 0.0
    %411 = vmatprep.subr.mxu0 0.0
    %412 = vmatpush1.msra.mxu0 0.0
    %413 = vmatprep.subr.mxu0 0.0
    %414 = vmatpush1.msra.mxu0 0.0
    %415 = vmatprep.subr.mxu0 0.0
    %416 = vmatpush1.msra.mxu0 0.0
    %417 = vmatprep.subr.mxu0 0.0
    %418 = vmatpush1.msra.mxu0 0.0
    %419 = vmatprep.subr.mxu0 0.0
    %420 = vmatpush1.msra.mxu0 0.0
    %421 = vmatprep.subr.mxu0 0.0
    %422 = vmatpush1.msra.mxu0 0.0
    %423 = vmatprep.subr.mxu0 0.0
    %424 = vmatpush1.msra.mxu0 0.0
    %425 = vmatprep.subr.mxu0 0.0
    %426 = vmatpush1.msra.mxu0 0.0
    %427 = vmatprep.subr.mxu0 0.0
    %428 = vmatpush1.msra.mxu0 0.0
    %429 = vmatprep.subr.mxu0 0.0
    %430 = vmatpush1.msra.mxu0 0.0
    %431 = vmatprep.subr.mxu0 0.0
    %432 = vmatpush1.msra.mxu0 0.0
    %433 = vmatprep.subr.mxu0 0.0
    %434 = vmatpush1.msra.mxu0 0.0
    %435 = vmatprep.subr.mxu0 0.0
    %436 = vmatpush1.msra.mxu0 0.0
    %437 = vmatprep.subr.mxu0 0.0
    %438 = vmatpush1.msra.mxu0 0.0
    %439 = vmatprep.subr.mxu0 0.0
    %440 = vmatpush1.msra.mxu0 0.0
    %441 = vmatprep.subr.mxu0 0.0
    %442 = vmatpush1.msra.mxu0 0.0
    %443 = vmatprep.subr.mxu0 0.0
    %444 = vmatpush1.msra.mxu0 0.0
    %445 = vmatprep.subr.mxu0 0.0
    %446 = vmatpush1.msra.mxu0 0.0
    %447 = vmatprep.mubr.f32.mxu0 0.0
    %448 = vmatmul.mubr.f32.gmra.mrb[0].mxu0 %v381
    %v449 = vpop.f32.mrb[0].mxu0
    %v450 = vadd.f32 0.0, %v449
    %v451 = vpop.f32.mrb[0].mxu0
    %452 = vdwg.mxu0
    %453 = vrot.lane.b32.xlu0 %v197, 64
    %v454 = vpop.permute.xlu0 %453
    %v457 = vsel %vm203, %v376, 0
    %459 = vmatprep.subr.mxu0 0.0
    %460 = vmatpush1.msra.mxu0 %v454
    %461 = vmatprep.subr.mxu0 0.0
    %462 = vmatpush1.msra.mxu0 0.0
    %463 = vmatprep.subr.mxu0 0.0
    %464 = vmatpush1.msra.mxu0 0.0
    %465 = vmatprep.subr.mxu0 0.0
    %466 = vmatpush1.msra.mxu0 0.0
    %467 = vmatprep.subr.mxu0 0.0
    %468 = vmatpush1.msra.mxu0 0.0
    %469 = vmatprep.subr.mxu0 0.0
    %470 = vmatpush1.msra.mxu0 0.0
    %471 = vmatprep.subr.mxu0 0.0
    %472 = vmatpush1.msra.mxu0 0.0
    %473 = vmatprep.subr.mxu0 0.0
    %474 = vmatpush1.msra.mxu0 0.0
    %475 = vmatprep.subr.mxu0 0.0
    %476 = vmatpush1.msra.mxu0 0.0
    %477 = vmatprep.subr.mxu0 0.0
    %478 = vmatpush1.msra.mxu0 0.0
    %479 = vmatprep.subr.mxu0 0.0
    %480 = vmatpush1.msra.mxu0 0.0
    %481 = vmatprep.subr.mxu0 0.0
    %482 = vmatpush1.msra.mxu0 0.0
    %483 = vmatprep.subr.mxu0 0.0
    %484 = vmatpush1.msra.mxu0 0.0
    %485 = vmatprep.subr.mxu0 0.0
    %486 = vmatpush1.msra.mxu0 0.0
    %487 = vmatprep.subr.mxu0 0.0
    %488 = vmatpush1.msra.mxu0 0.0
    %489 = vmatprep.subr.mxu0 0.0
    %490 = vmatpush1.msra.mxu0 0.0
    %491 = vmatprep.subr.mxu0 0.0
    %492 = vmatpush1.msra.mxu0 0.0
    %493 = vmatprep.subr.mxu0 0.0
    %494 = vmatpush1.msra.mxu0 0.0
    %495 = vmatprep.subr.mxu0 0.0
    %496 = vmatpush1.msra.mxu0 0.0
    %497 = vmatprep.subr.mxu0 0.0
    %498 = vmatpush1.msra.mxu0 0.0
    %499 = vmatprep.subr.mxu0 0.0
    %500 = vmatpush1.msra.mxu0 0.0
    %501 = vmatprep.subr.mxu0 0.0
    %502 = vmatpush1.msra.mxu0 0.0
    %503 = vmatprep.subr.mxu0 0.0
    %504 = vmatpush1.msra.mxu0 0.0
    %505 = vmatprep.subr.mxu0 0.0
    %506 = vmatpush1.msra.mxu0 0.0
    %507 = vmatprep.subr.mxu0 0.0
    %508 = vmatpush1.msra.mxu0 0.0
    %509 = vmatprep.subr.mxu0 0.0
    %510 = vmatpush1.msra.mxu0 0.0
    %511 = vmatprep.subr.mxu0 0.0
    %512 = vmatpush1.msra.mxu0 0.0
    %513 = vmatprep.subr.mxu0 0.0
    %514 = vmatpush1.msra.mxu0 0.0
    %515 = vmatprep.subr.mxu0 0.0
    %516 = vmatpush1.msra.mxu0 0.0
    %517 = vmatprep.subr.mxu0 0.0
    %518 = vmatpush1.msra.mxu0 0.0
    %519 = vmatprep.subr.mxu0 0.0
    %520 = vmatpush1.msra.mxu0 0.0
    %521 = vmatprep.subr.mxu0 0.0
    %522 = vmatpush1.msra.mxu0 0.0
    %523 = vmatprep.mubr.f32.mxu0 0.0
    %524 = vmatmul.mubr.f32.gmra.mrb[0].mxu0 %v457
    %v525 = vpop.f32.mrb[0].mxu0
    %v526 = vadd.f32 0.0, %v525
    %v527 = vpop.f32.mrb[0].mxu0
    %528 = vdwg.mxu0
    %529 = vst.msk [vmem:[#allocation2] sm:$0xff] %vm203, %v450
    %530 = vst.msk [vmem:[#allocation2 + $0x8] sm:$0xff] %vm203, %v526
    %531 = vrot.lane.b32.xlu0 %v192, 120
    %v532 = vpop.permute.xlu0 %531
    %533 = vrot.lane.b32.xlu0 %v192, 88
    %v534 = vpop.permute.xlu0 %533
    %v535 = vsel %vm203, %v532, 0
    %v537 = vsel %vm203, %v534, 0
    %539 = vmatprep.subr.mxu0 0.0
    %540 = vmatpush1.xpose.msra.mxu0 %v537
    %541 = vmatprep.subr.mxu0 0.0
    %542 = vmatpush1.xpose.msra.mxu0 0.0
    %543 = vmatprep.subr.mxu0 0.0
    %544 = vmatpush1.xpose.msra.mxu0 0.0
    %545 = vmatprep.subr.mxu0 0.0
    %546 = vmatpush1.xpose.msra.mxu0 0.0
    %547 = vmatprep.subr.mxu0 0.0
    %548 = vmatpush1.xpose.msra.mxu0 0.0
    %549 = vmatprep.subr.mxu0 0.0
    %550 = vmatpush1.xpose.msra.mxu0 0.0
    %551 = vmatprep.subr.mxu0 0.0
    %552 = vmatpush1.xpose.msra.mxu0 0.0
    %553 = vmatprep.subr.mxu0 0.0
    %554 = vmatpush1.xpose.msra.mxu0 0.0
    %555 = vmatprep.subr.mxu0 0.0
    %556 = vmatpush1.xpose.msra.mxu0 0.0
    %557 = vmatprep.subr.mxu0 0.0
    %558 = vmatpush1.xpose.msra.mxu0 0.0
    %559 = vmatprep.subr.mxu0 0.0
    %560 = vmatpush1.xpose.msra.mxu0 0.0
    %561 = vmatprep.subr.mxu0 0.0
    %562 = vmatpush1.xpose.msra.mxu0 0.0
    %563 = vmatprep.subr.mxu0 0.0
    %564 = vmatpush1.xpose.msra.mxu0 0.0
    %565 = vmatprep.subr.mxu0 0.0
    %566 = vmatpush1.xpose.msra.mxu0 0.0
    %567 = vmatprep.subr.mxu0 0.0
    %568 = vmatpush1.xpose.msra.mxu0 0.0
    %569 = vmatprep.subr.mxu0 0.0
    %570 = vmatpush1.xpose.msra.mxu0 0.0
    %571 = vmatprep.subr.mxu0 0.0
    %572 = vmatpush1.xpose.msra.mxu0 0.0
    %573 = vmatprep.subr.mxu0 0.0
    %574 = vmatpush1.xpose.msra.mxu0 0.0
    %575 = vmatprep.subr.mxu0 0.0
    %576 = vmatpush1.xpose.msra.mxu0 0.0
    %577 = vmatprep.subr.mxu0 0.0
    %578 = vmatpush1.xpose.msra.mxu0 0.0
    %579 = vmatprep.subr.mxu0 0.0
    %580 = vmatpush1.xpose.msra.mxu0 0.0
    %581 = vmatprep.subr.mxu0 0.0
    %582 = vmatpush1.xpose.msra.mxu0 0.0
    %583 = vmatprep.subr.mxu0 0.0
    %584 = vmatpush1.xpose.msra.mxu0 0.0
    %585 = vmatprep.subr.mxu0 0.0
    %586 = vmatpush1.xpose.msra.mxu0 0.0
    %587 = vmatprep.subr.mxu0 0.0
    %588 = vmatpush1.xpose.msra.mxu0 0.0
    %589 = vmatprep.subr.mxu0 0.0
    %590 = vmatpush1.xpose.msra.mxu0 0.0
    %591 = vmatprep.subr.mxu0 0.0
    %592 = vmatpush1.xpose.msra.mxu0 0.0
    %593 = vmatprep.subr.mxu0 0.0
    %594 = vmatpush1.xpose.msra.mxu0 0.0
    %595 = vmatprep.subr.mxu0 0.0
    %596 = vmatpush1.xpose.msra.mxu0 0.0
    %597 = vmatprep.subr.mxu0 0.0
    %598 = vmatpush1.xpose.msra.mxu0 0.0
    %599 = vmatprep.subr.mxu0 0.0
    %600 = vmatpush1.xpose.msra.mxu0 0.0
    %601 = vmatprep.subr.mxu0 0.0
    %602 = vmatpush1.xpose.msra.mxu0 0.0
    %603 = vmatprep.mubr.f32.mxu0 0.0
    %604 = vmatmul.mubr.f32.gmra.mrb[0].mxu0 %v535
    %v605 = vpop.f32.mrb[0].mxu0
    %v606 = vadd.f32 0.0, %v605
    %v607 = vpop.f32.mrb[0].mxu0
    %608 = vdwg.mxu0
    %609 = vrot.lane.b32.xlu0 %v197, 120
    %v610 = vpop.permute.xlu0 %609
    %611 = vrot.lane.b32.xlu0 %v197, 88
    %v612 = vpop.permute.xlu0 %611
    %v613 = vsel %vm203, %v610, 0
    %v615 = vsel %vm203, %v612, 0
    %617 = vmatprep.subr.mxu0 0.0
    %618 = vmatpush1.xpose.msra.mxu0 %v615
    %619 = vmatprep.subr.mxu0 0.0
    %620 = vmatpush1.xpose.msra.mxu0 0.0
    %621 = vmatprep.subr.mxu0 0.0
    %622 = vmatpush1.xpose.msra.mxu0 0.0
    %623 = vmatprep.subr.mxu0 0.0
    %624 = vmatpush1.xpose.msra.mxu0 0.0
    %625 = vmatprep.subr.mxu0 0.0
    %626 = vmatpush1.xpose.msra.mxu0 0.0
    %627 = vmatprep.subr.mxu0 0.0
    %628 = vmatpush1.xpose.msra.mxu0 0.0
    %629 = vmatprep.subr.mxu0 0.0
    %630 = vmatpush1.xpose.msra.mxu0 0.0
    %631 = vmatprep.subr.mxu0 0.0
    %632 = vmatpush1.xpose.msra.mxu0 0.0
    %633 = vmatprep.subr.mxu0 0.0
    %634 = vmatpush1.xpose.msra.mxu0 0.0
    %635 = vmatprep.subr.mxu0 0.0
    %636 = vmatpush1.xpose.msra.mxu0 0.0
    %637 = vmatprep.subr.mxu0 0.0
    %638 = vmatpush1.xpose.msra.mxu0 0.0
    %639 = vmatprep.subr.mxu0 0.0
    %640 = vmatpush1.xpose.msra.mxu0 0.0
    %641 = vmatprep.subr.mxu0 0.0
    %642 = vmatpush1.xpose.msra.mxu0 0.0
    %643 = vmatprep.subr.mxu0 0.0
    %644 = vmatpush1.xpose.msra.mxu0 0.0
    %645 = vmatprep.subr.mxu0 0.0
    %646 = vmatpush1.xpose.msra.mxu0 0.0
    %647 = vmatprep.subr.mxu0 0.0
    %648 = vmatpush1.xpose.msra.mxu0 0.0
    %649 = vmatprep.subr.mxu0 0.0
    %650 = vmatpush1.xpose.msra.mxu0 0.0
    %651 = vmatprep.subr.mxu0 0.0
    %652 = vmatpush1.xpose.msra.mxu0 0.0
    %653 = vmatprep.subr.mxu0 0.0
    %654 = vmatpush1.xpose.msra.mxu0 0.0
    %655 = vmatprep.subr.mxu0 0.0
    %656 = vmatpush1.xpose.msra.mxu0 0.0
    %657 = vmatprep.subr.mxu0 0.0
    %658 = vmatpush1.xpose.msra.mxu0 0.0
    %659 = vmatprep.subr.mxu0 0.0
    %660 = vmatpush1.xpose.msra.mxu0 0.0
    %661 = vmatprep.subr.mxu0 0.0
    %662 = vmatpush1.xpose.msra.mxu0 0.0
    %663 = vmatprep.subr.mxu0 0.0
    %664 = vmatpush1.xpose.msra.mxu0 0.0
    %665 = vmatprep.subr.mxu0 0.0
    %666 = vmatpush1.xpose.msra.mxu0 0.0
    %667 = vmatprep.subr.mxu0 0.0
    %668 = vmatpush1.xpose.msra.mxu0 0.0
    %669 = vmatprep.subr.mxu0 0.0
    %670 = vmatpush1.xpose.msra.mxu0 0.0
    %671 = vmatprep.subr.mxu0 0.0
    %672 = vmatpush1.xpose.msra.mxu0 0.0
    %673 = vmatprep.subr.mxu0 0.0
    %674 = vmatpush1.xpose.msra.mxu0 0.0
    %675 = vmatprep.subr.mxu0 0.0
    %676 = vmatpush1.xpose.msra.mxu0 0.0
    %677 = vmatprep.subr.mxu0 0.0
    %678 = vmatpush1.xpose.msra.mxu0 0.0
    %679 = vmatprep.subr.mxu0 0.0
    %680 = vmatpush1.xpose.msra.mxu0 0.0
    %681 = vmatprep.mubr.f32.mxu0 0.0
    %682 = vmatmul.mubr.f32.gmra.mrb[0].mxu0 %v613
    %v683 = vpop.f32.mrb[0].mxu0
    %v684 = vadd.f32 0.0, %v683
    %v685 = vpop.f32.mrb[0].mxu0
    %686 = vdwg.mxu0
    %v687 = vsel %vm203, %v606, -inf
    %688 = vmax.xlane.f32.xlu0 %v687
    %v689 = vpop.xlane.xlu0 %688
    %v690 = vsel %vm203, %v684, -inf
    %691 = vmax.xlane.f32.xlu0 %v690
    %v692 = vpop.xlane.xlu0 %691
    %v693 = vsub.f32 %v606, %v689
    %v694 = vsub.f32 %v684, %v692
    %v695 = vmul.f32 %v693, 1.442695
    %v696 = vpow.pop %v695
    %v697 = vmul.f32 %v694, 1.442695
    %v698 = vpow.pop %v697
    %v699 = vsel %vm203, %v696, 0.0
    %700 = vadd.xlane.f32.xlu0 %v699
    %v701 = vpop.xlane.xlu0 %700
    %v702 = vsel %vm203, %v698, 0.0
    %703 = vadd.xlane.f32.xlu0 %v702
    %v704 = vpop.xlane.xlu0 %703
    %v705 = vrcp.pop %v701
    %v706 = vrcp.pop %v704
    %v707 = vmul.f32 %v696, %v705
    %v708 = vmul.f32 %v698, %v706
    %709 = vrot.lane.b32.xlu0 %v192, 56
    %v710 = vpop.permute.xlu0 %709
    %v713 = vsel %vm203, %v707, 0
    %715 = vmatprep.subr.mxu0 0.0
    %716 = vmatpush1.msra.mxu0 %v710
    %717 = vmatprep.subr.mxu0 0.0
    %718 = vmatpush1.msra.mxu0 0.0
    %719 = vmatprep.subr.mxu0 0.0
    %720 = vmatpush1.msra.mxu0 0.0
    %721 = vmatprep.subr.mxu0 0.0
    %722 = vmatpush1.msra.mxu0 0.0
    %723 = vmatprep.subr.mxu0 0.0
    %724 = vmatpush1.msra.mxu0 0.0
    %725 = vmatprep.subr.mxu0 0.0
    %726 = vmatpush1.msra.mxu0 0.0
    %727 = vmatprep.subr.mxu0 0.0
    %728 = vmatpush1.msra.mxu0 0.0
    %729 = vmatprep.subr.mxu0 0.0
    %730 = vmatpush1.msra.mxu0 0.0
    %731 = vmatprep.subr.mxu0 0.0
    %732 = vmatpush1.msra.mxu0 0.0
    %733 = vmatprep.subr.mxu0 0.0
    %734 = vmatpush1.msra.mxu0 0.0
    %735 = vmatprep.subr.mxu0 0.0
    %736 = vmatpush1.msra.mxu0 0.0
    %737 = vmatprep.subr.mxu0 0.0
    %738 = vmatpush1.msra.mxu0 0.0
    %739 = vmatprep.subr.mxu0 0.0
    %740 = vmatpush1.msra.mxu0 0.0
    %741 = vmatprep.subr.mxu0 0.0
    %742 = vmatpush1.msra.mxu0 0.0
    %743 = vmatprep.subr.mxu0 0.0
    %744 = vmatpush1.msra.mxu0 0.0
    %745 = vmatprep.subr.mxu0 0.0
    %746 = vmatpush1.msra.mxu0 0.0
    %747 = vmatprep.subr.mxu0 0.0
    %748 = vmatpush1.msra.mxu0 0.0
    %749 = vmatprep.subr.mxu0 0.0
    %750 = vmatpush1.msra.mxu0 0.0
    %751 = vmatprep.subr.mxu0 0.0
    %752 = vmatpush1.msra.mxu0 0.0
    %753 = vmatprep.subr.mxu0 0.0
    %754 = vmatpush1.msra.mxu0 0.0
    %755 = vmatprep.subr.mxu0 0.0
    %756 = vmatpush1.msra.mxu0 0.0
    %757 = vmatprep.subr.mxu0 0.0
    %758 = vmatpush1.msra.mxu0 0.0
    %759 = vmatprep.subr.mxu0 0.0
    %760 = vmatpush1.msra.mxu0 0.0
    %761 = vmatprep.subr.mxu0 0.0
    %762 = vmatpush1.msra.mxu0 0.0
    %763 = vmatprep.subr.mxu0 0.0
    %764 = vmatpush1.msra.mxu0 0.0
    %765 = vmatprep.subr.mxu0 0.0
    %766 = vmatpush1.msra.mxu0 0.0
    %767 = vmatprep.subr.mxu0 0.0
    %768 = vmatpush1.msra.mxu0 0.0
    %769 = vmatprep.subr.mxu0 0.0
    %770 = vmatpush1.msra.mxu0 0.0
    %771 = vmatprep.subr.mxu0 0.0
    %772 = vmatpush1.msra.mxu0 0.0
    %773 = vmatprep.subr.mxu0 0.0
    %774 = vmatpush1.msra.mxu0 0.0
    %775 = vmatprep.subr.mxu0 0.0
    %776 = vmatpush1.msra.mxu0 0.0
    %777 = vmatprep.subr.mxu0 0.0
    %778 = vmatpush1.msra.mxu0 0.0
    %779 = vmatprep.mubr.f32.mxu0 0.0
    %780 = vmatmul.mubr.f32.gmra.mrb[0].mxu0 %v713
    %v781 = vpop.f32.mrb[0].mxu0
    %v782 = vadd.f32 0.0, %v781
    %v783 = vpop.f32.mrb[0].mxu0
    %784 = vdwg.mxu0
    %785 = vrot.lane.b32.xlu0 %v197, 56
    %v786 = vpop.permute.xlu0 %785
    %v789 = vsel %vm203, %v708, 0
    %791 = vmatprep.subr.mxu0 0.0
    %792 = vmatpush1.msra.mxu0 %v786
    %793 = vmatprep.subr.mxu0 0.0
    %794 = vmatpush1.msra.mxu0 0.0
    %795 = vmatprep.subr.mxu0 0.0
    %796 = vmatpush1.msra.mxu0 0.0
    %797 = vmatprep.subr.mxu0 0.0
    %798 = vmatpush1.msra.mxu0 0.0
    %799 = vmatprep.subr.mxu0 0.0
    %800 = vmatpush1.msra.mxu0 0.0
    %801 = vmatprep.subr.mxu0 0.0
    %802 = vmatpush1.msra.mxu0 0.0
    %803 = vmatprep.subr.mxu0 0.0
    %804 = vmatpush1.msra.mxu0 0.0
    %805 = vmatprep.subr.mxu0 0.0
    %806 = vmatpush1.msra.mxu0 0.0
    %807 = vmatprep.subr.mxu0 0.0
    %808 = vmatpush1.msra.mxu0 0.0
    %809 = vmatprep.subr.mxu0 0.0
    %810 = vmatpush1.msra.mxu0 0.0
    %811 = vmatprep.subr.mxu0 0.0
    %812 = vmatpush1.msra.mxu0 0.0
    %813 = vmatprep.subr.mxu0 0.0
    %814 = vmatpush1.msra.mxu0 0.0
    %815 = vmatprep.subr.mxu0 0.0
    %816 = vmatpush1.msra.mxu0 0.0
    %817 = vmatprep.subr.mxu0 0.0
    %818 = vmatpush1.msra.mxu0 0.0
    %819 = vmatprep.subr.mxu0 0.0
    %820 = vmatpush1.msra.mxu0 0.0
    %821 = vmatprep.subr.mxu0 0.0
    %822 = vmatpush1.msra.mxu0 0.0
    %823 = vmatprep.subr.mxu0 0.0
    %824 = vmatpush1.msra.mxu0 0.0
    %825 = vmatprep.subr.mxu0 0.0
    %826 = vmatpush1.msra.mxu0 0.0
    %827 = vmatprep.subr.mxu0 0.0
    %828 = vmatpush1.msra.mxu0 0.0
    %829 = vmatprep.subr.mxu0 0.0
    %830 = vmatpush1.msra.mxu0 0.0
    %831 = vmatprep.subr.mxu0 0.0
    %832 = vmatpush1.msra.mxu0 0.0
    %833 = vmatprep.subr.mxu0 0.0
    %834 = vmatpush1.msra.mxu0 0.0
    %835 = vmatprep.subr.mxu0 0.0
    %836 = vmatpush1.msra.mxu0 0.0
    %837 = vmatprep.subr.mxu0 0.0
    %838 = vmatpush1.msra.mxu0 0.0
    %839 = vmatprep.subr.mxu0 0.0
    %840 = vmatpush1.msra.mxu0 0.0
    %841 = vmatprep.subr.mxu0 0.0
    %842 = vmatpush1.msra.mxu0 0.0
    %843 = vmatprep.subr.mxu0 0.0
    %844 = vmatpush1.msra.mxu0 0.0
    %845 = vmatprep.subr.mxu0 0.0
    %846 = vmatpush1.msra.mxu0 0.0
    %847 = vmatprep.subr.mxu0 0.0
    %848 = vmatpush1.msra.mxu0 0.0
    %849 = vmatprep.subr.mxu0 0.0
    %850 = vmatpush1.msra.mxu0 0.0
    %851 = vmatprep.subr.mxu0 0.0
    %852 = vmatpush1.msra.mxu0 0.0
    %853 = vmatprep.subr.mxu0 0.0
    %854 = vmatpush1.msra.mxu0 0.0
    %855 = vmatprep.mubr.f32.mxu0 0.0
    %856 = vmatmul.mubr.f32.gmra.mrb[0].mxu0 %v789
    %v857 = vpop.f32.mrb[0].mxu0
    %v858 = vadd.f32 0.0, %v857
    %v859 = vpop.f32.mrb[0].mxu0
    %860 = vdwg.mxu0
    %863 = vrot.lane.b32.xlu0 %v782, 8
    %v864 = vpop.permute.xlu0 %863
    %865 = vrot.lane.b32.xlu0 %v858, 8
    %v866 = vpop.permute.xlu0 %865
    %vm869 = vcmask 130112
    %870 = vst.msk [vmem:[#allocation2] sm:$0xff] %vm869, %v864
    %871 = vst.msk [vmem:[#allocation2 + $0x8] sm:$0xff] %vm869, %v866
    %872 = vrot.lane.b32.xlu0 %v192, 112
    %v873 = vpop.permute.xlu0 %872
    %874 = vrot.lane.b32.xlu0 %v192, 80
    %v875 = vpop.permute.xlu0 %874
    %v876 = vsel %vm203, %v873, 0
    %v878 = vsel %vm203, %v875, 0
    %880 = vmatprep.subr.mxu0 0.0
    %881 = vmatpush1.xpose.msra.mxu0 %v878
    %882 = vmatprep.subr.mxu0 0.0
    %883 = vmatpush1.xpose.msra.mxu0 0.0
    %884 = vmatprep.subr.mxu0 0.0
    %885 = vmatpush1.xpose.msra.mxu0 0.0
    %886 = vmatprep.subr.mxu0 0.0
    %887 = vmatpush1.xpose.msra.mxu0 0.0
    %888 = vmatprep.subr.mxu0 0.0
    %889 = vmatpush1.xpose.msra.mxu0 0.0
    %890 = vmatprep.subr.mxu0 0.0
    %891 = vmatpush1.xpose.msra.mxu0 0.0
    %892 = vmatprep.subr.mxu0 0.0
    %893 = vmatpush1.xpose.msra.mxu0 0.0
    %894 = vmatprep.subr.mxu0 0.0
    %895 = vmatpush1.xpose.msra.mxu0 0.0
    %896 = vmatprep.subr.mxu0 0.0
    %897 = vmatpush1.xpose.msra.mxu0 0.0
    %898 = vmatprep.subr.mxu0 0.0
    %899 = vmatpush1.xpose.msra.mxu0 0.0
    %900 = vmatprep.subr.mxu0 0.0
    %901 = vmatpush1.xpose.msra.mxu0 0.0
    %902 = vmatprep.subr.mxu0 0.0
    %903 = vmatpush1.xpose.msra.mxu0 0.0
    %904 = vmatprep.subr.mxu0 0.0
    %905 = vmatpush1.xpose.msra.mxu0 0.0
    %906 = vmatprep.subr.mxu0 0.0
    %907 = vmatpush1.xpose.msra.mxu0 0.0
    %908 = vmatprep.subr.mxu0 0.0
    %909 = vmatpush1.xpose.msra.mxu0 0.0
    %910 = vmatprep.subr.mxu0 0.0
    %911 = vmatpush1.xpose.msra.mxu0 0.0
    %912 = vmatprep.subr.mxu0 0.0
    %913 = vmatpush1.xpose.msra.mxu0 0.0
    %914 = vmatprep.subr.mxu0 0.0
    %915 = vmatpush1.xpose.msra.mxu0 0.0
    %916 = vmatprep.subr.mxu0 0.0
    %917 = vmatpush1.xpose.msra.mxu0 0.0
    %918 = vmatprep.subr.mxu0 0.0
    %919 = vmatpush1.xpose.msra.mxu0 0.0
    %920 = vmatprep.subr.mxu0 0.0
    %921 = vmatpush1.xpose.msra.mxu0 0.0
    %922 = vmatprep.subr.mxu0 0.0
    %923 = vmatpush1.xpose.msra.mxu0 0.0
    %924 = vmatprep.subr.mxu0 0.0
    %925 = vmatpush1.xpose.msra.mxu0 0.0
    %926 = vmatprep.subr.mxu0 0.0
    %927 = vmatpush1.xpose.msra.mxu0 0.0
    %928 = vmatprep.subr.mxu0 0.0
    %929 = vmatpush1.xpose.msra.mxu0 0.0
    %930 = vmatprep.subr.mxu0 0.0
    %931 = vmatpush1.xpose.msra.mxu0 0.0
    %932 = vmatprep.subr.mxu0 0.0
    %933 = vmatpush1.xpose.msra.mxu0 0.0
    %934 = vmatprep.subr.mxu0 0.0
    %935 = vmatpush1.xpose.msra.mxu0 0.0
    %936 = vmatprep.subr.mxu0 0.0
    %937 = vmatpush1.xpose.msra.mxu0 0.0
    %938 = vmatprep.subr.mxu0 0.0
    %939 = vmatpush1.xpose.msra.mxu0 0.0
    %940 = vmatprep.subr.mxu0 0.0
    %941 = vmatpush1.xpose.msra.mxu0 0.0
    %942 = vmatprep.subr.mxu0 0.0
    %943 = vmatpush1.xpose.msra.mxu0 0.0
    %944 = vmatprep.mubr.f32.mxu0 0.0
    %945 = vmatmul.mubr.f32.gmra.mrb[0].mxu0 %v876
    %v946 = vpop.f32.mrb[0].mxu0
    %v947 = vadd.f32 0.0, %v946
    %v948 = vpop.f32.mrb[0].mxu0
    %949 = vdwg.mxu0
    %950 = vrot.lane.b32.xlu0 %v197, 112
    %v951 = vpop.permute.xlu0 %950
    %952 = vrot.lane.b32.xlu0 %v197, 80
    %v953 = vpop.permute.xlu0 %952
    %v954 = vsel %vm203, %v951, 0
    %v956 = vsel %vm203, %v953, 0
    %958 = vmatprep.subr.mxu0 0.0
    %959 = vmatpush1.xpose.msra.mxu0 %v956
    %960 = vmatprep.subr.mxu0 0.0
    %961 = vmatpush1.xpose.msra.mxu0 0.0
    %962 = vmatprep.subr.mxu0 0.0
    %963 = vmatpush1.xpose.msra.mxu0 0.0
    %964 = vmatprep.subr.mxu0 0.0
    %965 = vmatpush1.xpose.msra.mxu0 0.0
    %966 = vmatprep.subr.mxu0 0.0
    %967 = vmatpush1.xpose.msra.mxu0 0.0
    %968 = vmatprep.subr.mxu0 0.0
    %969 = vmatpush1.xpose.msra.mxu0 0.0
    %970 = vmatprep.subr.mxu0 0.0
    %971 = vmatpush1.xpose.msra.mxu0 0.0
    %972 = vmatprep.subr.mxu0 0.0
    %973 = vmatpush1.xpose.msra.mxu0 0.0
    %974 = vmatprep.subr.mxu0 0.0
    %975 = vmatpush1.xpose.msra.mxu0 0.0
    %976 = vmatprep.subr.mxu0 0.0
    %977 = vmatpush1.xpose.msra.mxu0 0.0
    %978 = vmatprep.subr.mxu0 0.0
    %979 = vmatpush1.xpose.msra.mxu0 0.0
    %980 = vmatprep.subr.mxu0 0.0
    %981 = vmatpush1.xpose.msra.mxu0 0.0
    %982 = vmatprep.subr.mxu0 0.0
    %983 = vmatpush1.xpose.msra.mxu0 0.0
    %984 = vmatprep.subr.mxu0 0.0
    %985 = vmatpush1.xpose.msra.mxu0 0.0
    %986 = vmatprep.subr.mxu0 0.0
    %987 = vmatpush1.xpose.msra.mxu0 0.0
    %988 = vmatprep.subr.mxu0 0.0
    %989 = vmatpush1.xpose.msra.mxu0 0.0
    %990 = vmatprep.subr.mxu0 0.0
    %991 = vmatpush1.xpose.msra.mxu0 0.0
    %992 = vmatprep.subr.mxu0 0.0
    %993 = vmatpush1.xpose.msra.mxu0 0.0
    %994 = vmatprep.subr.mxu0 0.0
    %995 = vmatpush1.xpose.msra.mxu0 0.0
    %996 = vmatprep.subr.mxu0 0.0
    %997 = vmatpush1.xpose.msra.mxu0 0.0
    %998 = vmatprep.subr.mxu0 0.0
    %999 = vmatpush1.xpose.msra.mxu0 0.0
    %1000 = vmatprep.subr.mxu0 0.0
    %1001 = vmatpush1.xpose.msra.mxu0 0.0
    %1002 = vmatprep.subr.mxu0 0.0
    %1003 = vmatpush1.xpose.msra.mxu0 0.0
    %1004 = vmatprep.subr.mxu0 0.0
    %1005 = vmatpush1.xpose.msra.mxu0 0.0
    %1006 = vmatprep.subr.mxu0 0.0
    %1007 = vmatpush1.xpose.msra.mxu0 0.0
    %1008 = vmatprep.subr.mxu0 0.0
    %1009 = vmatpush1.xpose.msra.mxu0 0.0
    %1010 = vmatprep.subr.mxu0 0.0
    %1011 = vmatpush1.xpose.msra.mxu0 0.0
    %1012 = vmatprep.subr.mxu0 0.0
    %1013 = vmatpush1.xpose.msra.mxu0 0.0
    %1014 = vmatprep.subr.mxu0 0.0
    %1015 = vmatpush1.xpose.msra.mxu0 0.0
    %1016 = vmatprep.subr.mxu0 0.0
    %1017 = vmatpush1.xpose.msra.mxu0 0.0
    %1018 = vmatprep.subr.mxu0 0.0
    %1019 = vmatpush1.xpose.msra.mxu0 0.0
    %1020 = vmatprep.subr.mxu0 0.0
    %1021 = vmatpush1.xpose.msra.mxu0 0.0
    %1022 = vmatprep.mubr.f32.mxu0 0.0
    %1023 = vmatmul.mubr.f32.gmra.mrb[0].mxu0 %v954
    %v1024 = vpop.f32.mrb[0].mxu0
    %v1025 = vadd.f32 0.0, %v1024
    %v1026 = vpop.f32.mrb[0].mxu0
    %1027 = vdwg.mxu0
    %v1028 = vsel %vm203, %v947, -inf
    %1029 = vmax.xlane.f32.xlu0 %v1028
    %v1030 = vpop.xlane.xlu0 %1029
    %v1031 = vsel %vm203, %v1025, -inf
    %1032 = vmax.xlane.f32.xlu0 %v1031
    %v1033 = vpop.xlane.xlu0 %1032
    %v1034 = vsub.f32 %v947, %v1030
    %v1035 = vsub.f32 %v1025, %v1033
    %v1036 = vmul.f32 %v1034, 1.442695
    %v1037 = vpow.pop %v1036
    %v1038 = vmul.f32 %v1035, 1.442695
    %v1039 = vpow.pop %v1038
    %v1040 = vsel %vm203, %v1037, 0.0
    %1041 = vadd.xlane.f32.xlu0 %v1040
    %v1042 = vpop.xlane.xlu0 %1041
    %v1043 = vsel %vm203, %v1039, 0.0
    %1044 = vadd.xlane.f32.xlu0 %v1043
    %v1045 = vpop.xlane.xlu0 %1044
    %v1046 = vrcp.pop %v1042
    %v1047 = vrcp.pop %v1045
    %v1048 = vmul.f32 %v1037, %v1046
    %v1049 = vmul.f32 %v1039, %v1047
    %1050 = vrot.lane.b32.xlu0 %v192, 48
    %v1051 = vpop.permute.xlu0 %1050
    %v1054 = vsel %vm203, %v1048, 0
    %1056 = vmatprep.subr.mxu0 0.0
    %1057 = vmatpush1.msra.mxu0 %v1051
    %1058 = vmatprep.subr.mxu0 0.0
    %1059 = vmatpush1.msra.mxu0 0.0
    %1060 = vmatprep.subr.mxu0 0.0
    %1061 = vmatpush1.msra.mxu0 0.0
    %1062 = vmatprep.subr.mxu0 0.0
    %1063 = vmatpush1.msra.mxu0 0.0
    %1064 = vmatprep.subr.mxu0 0.0
    %1065 = vmatpush1.msra.mxu0 0.0
    %1066 = vmatprep.subr.mxu0 0.0
    %1067 = vmatpush1.msra.mxu0 0.0
    %1068 = vmatprep.subr.mxu0 0.0
    %1069 = vmatpush1.msra.mxu0 0.0
    %1070 = vmatprep.subr.mxu0 0.0
    %1071 = vmatpush1.msra.mxu0 0.0
    %1072 = vmatprep.subr.mxu0 0.0
    %1073 = vmatpush1.msra.mxu0 0.0
    %1074 = vmatprep.subr.mxu0 0.0
    %1075 = vmatpush1.msra.mxu0 0.0
    %1076 = vmatprep.subr.mxu0 0.0
    %1077 = vmatpush1.msra.mxu0 0.0
    %1078 = vmatprep.subr.mxu0 0.0
    %1079 = vmatpush1.msra.mxu0 0.0
    %1080 = vmatprep.subr.mxu0 0.0
    %1081 = vmatpush1.msra.mxu0 0.0
    %1082 = vmatprep.subr.mxu0 0.0
    %1083 = vmatpush1.msra.mxu0 0.0
    %1084 = vmatprep.subr.mxu0 0.0
    %1085 = vmatpush1.msra.mxu0 0.0
    %1086 = vmatprep.subr.mxu0 0.0
    %1087 = vmatpush1.msra.mxu0 0.0
    %1088 = vmatprep.subr.mxu0 0.0
    %1089 = vmatpush1.msra.mxu0 0.0
    %1090 = vmatprep.subr.mxu0 0.0
    %1091 = vmatpush1.msra.mxu0 0.0
    %1092 = vmatprep.subr.mxu0 0.0
    %1093 = vmatpush1.msra.mxu0 0.0
    %1094 = vmatprep.subr.mxu0 0.0
    %1095 = vmatpush1.msra.mxu0 0.0
    %1096 = vmatprep.subr.mxu0 0.0
    %1097 = vmatpush1.msra.mxu0 0.0
    %1098 = vmatprep.subr.mxu0 0.0
    %1099 = vmatpush1.msra.mxu0 0.0
    %1100 = vmatprep.subr.mxu0 0.0
    %1101 = vmatpush1.msra.mxu0 0.0
    %1102 = vmatprep.subr.mxu0 0.0
    %1103 = vmatpush1.msra.mxu0 0.0
    %1104 = vmatprep.subr.mxu0 0.0
    %1105 = vmatpush1.msra.mxu0 0.0
    %1106 = vmatprep.subr.mxu0 0.0
    %1107 = vmatpush1.msra.mxu0 0.0
    %1108 = vmatprep.subr.mxu0 0.0
    %1109 = vmatpush1.msra.mxu0 0.0
    %1110 = vmatprep.subr.mxu0 0.0
    %1111 = vmatpush1.msra.mxu0 0.0
    %1112 = vmatprep.subr.mxu0 0.0
    %1113 = vmatpush1.msra.mxu0 0.0
    %1114 = vmatprep.subr.mxu0 0.0
    %1115 = vmatpush1.msra.mxu0 0.0
    %1116 = vmatprep.subr.mxu0 0.0
    %1117 = vmatpush1.msra.mxu0 0.0
    %1118 = vmatprep.subr.mxu0 0.0
    %1119 = vmatpush1.msra.mxu0 0.0
    %1120 = vmatprep.mubr.f32.mxu0 0.0
    %1121 = vmatmul.mubr.f32.gmra.mrb[0].mxu0 %v1054
    %v1122 = vpop.f32.mrb[0].mxu0
    %v1123 = vadd.f32 0.0, %v1122
    %v1124 = vpop.f32.mrb[0].mxu0
    %1125 = vdwg.mxu0
    %1126 = vrot.lane.b32.xlu0 %v197, 48
    %v1127 = vpop.permute.xlu0 %1126
    %v1130 = vsel %vm203, %v1049, 0
    %1132 = vmatprep.subr.mxu0 0.0
    %1133 = vmatpush1.msra.mxu0 %v1127
    %1134 = vmatprep.subr.mxu0 0.0
    %1135 = vmatpush1.msra.mxu0 0.0
    %1136 = vmatprep.subr.mxu0 0.0
    %1137 = vmatpush1.msra.mxu0 0.0
    %1138 = vmatprep.subr.mxu0 0.0
    %1139 = vmatpush1.msra.mxu0 0.0
    %1140 = vmatprep.subr.mxu0 0.0
    %1141 = vmatpush1.msra.mxu0 0.0
    %1142 = vmatprep.subr.mxu0 0.0
    %1143 = vmatpush1.msra.mxu0 0.0
    %1144 = vmatprep.subr.mxu0 0.0
    %1145 = vmatpush1.msra.mxu0 0.0
    %1146 = vmatprep.subr.mxu0 0.0
    %1147 = vmatpush1.msra.mxu0 0.0
    %1148 = vmatprep.subr.mxu0 0.0
    %1149 = vmatpush1.msra.mxu0 0.0
    %1150 = vmatprep.subr.mxu0 0.0
    %1151 = vmatpush1.msra.mxu0 0.0
    %1152 = vmatprep.subr.mxu0 0.0
    %1153 = vmatpush1.msra.mxu0 0.0
    %1154 = vmatprep.subr.mxu0 0.0
    %1155 = vmatpush1.msra.mxu0 0.0
    %1156 = vmatprep.subr.mxu0 0.0
    %1157 = vmatpush1.msra.mxu0 0.0
    %1158 = vmatprep.subr.mxu0 0.0
    %1159 = vmatpush1.msra.mxu0 0.0
    %1160 = vmatprep.subr.mxu0 0.0
    %1161 = vmatpush1.msra.mxu0 0.0
    %1162 = vmatprep.subr.mxu0 0.0
    %1163 = vmatpush1.msra.mxu0 0.0
    %1164 = vmatprep.subr.mxu0 0.0
    %1165 = vmatpush1.msra.mxu0 0.0
    %1166 = vmatprep.subr.mxu0 0.0
    %1167 = vmatpush1.msra.mxu0 0.0
    %1168 = vmatprep.subr.mxu0 0.0
    %1169 = vmatpush1.msra.mxu0 0.0
    %1170 = vmatprep.subr.mxu0 0.0
    %1171 = vmatpush1.msra.mxu0 0.0
    %1172 = vmatprep.subr.mxu0 0.0
    %1173 = vmatpush1.msra.mxu0 0.0
    %1174 = vmatprep.subr.mxu0 0.0
    %1175 = vmatpush1.msra.mxu0 0.0
    %1176 = vmatprep.subr.mxu0 0.0
    %1177 = vmatpush1.msra.mxu0 0.0
    %1178 = vmatprep.subr.mxu0 0.0
    %1179 = vmatpush1.msra.mxu0 0.0
    %1180 = vmatprep.subr.mxu0 0.0
    %1181 = vmatpush1.msra.mxu0 0.0
    %1182 = vmatprep.subr.mxu0 0.0
    %1183 = vmatpush1.msra.mxu0 0.0
    %1184 = vmatprep.subr.mxu0 0.0
    %1185 = vmatpush1.msra.mxu0 0.0
    %1186 = vmatprep.subr.mxu0 0.0
    %1187 = vmatpush1.msra.mxu0 0.0
    %1188 = vmatprep.subr.mxu0 0.0
    %1189 = vmatpush1.msra.mxu0 0.0
    %1190 = vmatprep.subr.mxu0 0.0
    %1191 = vmatpush1.msra.mxu0 0.0
    %1192 = vmatprep.subr.mxu0 0.0
    %1193 = vmatpush1.msra.mxu0 0.0
    %1194 = vmatprep.subr.mxu0 0.0
    %1195 = vmatpush1.msra.mxu0 0.0
    %1196 = vmatprep.mubr.f32.mxu0 0.0
    %1197 = vmatmul.mubr.f32.gmra.mrb[0].mxu0 %v1130
    %v1198 = vpop.f32.mrb[0].mxu0
    %v1199 = vadd.f32 0.0, %v1198
    %v1200 = vpop.f32.mrb[0].mxu0
    %1201 = vdwg.mxu0
    %1204 = vrot.lane.b32.xlu0 %v1123, 16
    %v1205 = vpop.permute.xlu0 %1204
    %1206 = vrot.lane.b32.xlu0 %v1199, 16
    %v1207 = vpop.permute.xlu0 %1206
    %vm1210 = vcmask 195712
    %1211 = vst.msk [vmem:[#allocation2] sm:$0xff] %vm1210, %v1205
    %1212 = vst.msk [vmem:[#allocation2 + $0x8] sm:$0xff] %vm1210, %v1207
    %1213 = vrot.lane.b32.xlu0 %v192, 104
    %v1214 = vpop.permute.xlu0 %1213
    %1215 = vrot.lane.b32.xlu0 %v192, 72
    %v1216 = vpop.permute.xlu0 %1215
    %v1217 = vsel %vm203, %v1214, 0
    %v1219 = vsel %vm203, %v1216, 0
    %1221 = vmatprep.subr.mxu0 0.0
    %1222 = vmatpush1.xpose.msra.mxu0 %v1219
    %1223 = vmatprep.subr.mxu0 0.0
    %1224 = vmatpush1.xpose.msra.mxu0 0.0
    %1225 = vmatprep.subr.mxu0 0.0
    %1226 = vmatpush1.xpose.msra.mxu0 0.0
    %1227 = vmatprep.subr.mxu0 0.0
    %1228 = vmatpush1.xpose.msra.mxu0 0.0
    %1229 = vmatprep.subr.mxu0 0.0
    %1230 = vmatpush1.xpose.msra.mxu0 0.0
    %1231 = vmatprep.subr.mxu0 0.0
    %1232 = vmatpush1.xpose.msra.mxu0 0.0
    %1233 = vmatprep.subr.mxu0 0.0
    %1234 = vmatpush1.xpose.msra.mxu0 0.0
    %1235 = vmatprep.subr.mxu0 0.0
    %1236 = vmatpush1.xpose.msra.mxu0 0.0
    %1237 = vmatprep.subr.mxu0 0.0
    %1238 = vmatpush1.xpose.msra.mxu0 0.0
    %1239 = vmatprep.subr.mxu0 0.0
    %1240 = vmatpush1.xpose.msra.mxu0 0.0
    %1241 = vmatprep.subr.mxu0 0.0
    %1242 = vmatpush1.xpose.msra.mxu0 0.0
    %1243 = vmatprep.subr.mxu0 0.0
    %1244 = vmatpush1.xpose.msra.mxu0 0.0
    %1245 = vmatprep.subr.mxu0 0.0
    %1246 = vmatpush1.xpose.msra.mxu0 0.0
    %1247 = vmatprep.subr.mxu0 0.0
    %1248 = vmatpush1.xpose.msra.mxu0 0.0
    %1249 = vmatprep.subr.mxu0 0.0
    %1250 = vmatpush1.xpose.msra.mxu0 0.0
    %1251 = vmatprep.subr.mxu0 0.0
    %1252 = vmatpush1.xpose.msra.mxu0 0.0
    %1253 = vmatprep.subr.mxu0 0.0
    %1254 = vmatpush1.xpose.msra.mxu0 0.0
    %1255 = vmatprep.subr.mxu0 0.0
    %1256 = vmatpush1.xpose.msra.mxu0 0.0
    %1257 = vmatprep.subr.mxu0 0.0
    %1258 = vmatpush1.xpose.msra.mxu0 0.0
    %1259 = vmatprep.subr.mxu0 0.0
    %1260 = vmatpush1.xpose.msra.mxu0 0.0
    %1261 = vmatprep.subr.mxu0 0.0
    %1262 = vmatpush1.xpose.msra.mxu0 0.0
    %1263 = vmatprep.subr.mxu0 0.0
    %1264 = vmatpush1.xpose.msra.mxu0 0.0
    %1265 = vmatprep.subr.mxu0 0.0
    %1266 = vmatpush1.xpose.msra.mxu0 0.0
    %1267 = vmatprep.subr.mxu0 0.0
    %1268 = vmatpush1.xpose.msra.mxu0 0.0
    %1269 = vmatprep.subr.mxu0 0.0
    %1270 = vmatpush1.xpose.msra.mxu0 0.0
    %1271 = vmatprep.subr.mxu0 0.0
    %1272 = vmatpush1.xpose.msra.mxu0 0.0
    %1273 = vmatprep.subr.mxu0 0.0
    %1274 = vmatpush1.xpose.msra.mxu0 0.0
    %1275 = vmatprep.subr.mxu0 0.0
    %1276 = vmatpush1.xpose.msra.mxu0 0.0
    %1277 = vmatprep.subr.mxu0 0.0
    %1278 = vmatpush1.xpose.msra.mxu0 0.0
    %1279 = vmatprep.subr.mxu0 0.0
    %1280 = vmatpush1.xpose.msra.mxu0 0.0
    %1281 = vmatprep.subr.mxu0 0.0
    %1282 = vmatpush1.xpose.msra.mxu0 0.0
    %1283 = vmatprep.subr.mxu0 0.0
    %1284 = vmatpush1.xpose.msra.mxu0 0.0
    %1285 = vmatprep.mubr.f32.mxu0 0.0
    %1286 = vmatmul.mubr.f32.gmra.mrb[0].mxu0 %v1217
    %v1287 = vpop.f32.mrb[0].mxu0
    %v1288 = vadd.f32 0.0, %v1287
    %v1289 = vpop.f32.mrb[0].mxu0
    %1290 = vdwg.mxu0
    %1291 = vrot.lane.b32.xlu0 %v197, 104
    %v1292 = vpop.permute.xlu0 %1291
    %1293 = vrot.lane.b32.xlu0 %v197, 72
    %v1294 = vpop.permute.xlu0 %1293
    %v1295 = vsel %vm203, %v1292, 0
    %v1297 = vsel %vm203, %v1294, 0
    %1299 = vmatprep.subr.mxu0 0.0
    %1300 = vmatpush1.xpose.msra.mxu0 %v1297
    %1301 = vmatprep.subr.mxu0 0.0
    %1302 = vmatpush1.xpose.msra.mxu0 0.0
    %1303 = vmatprep.subr.mxu0 0.0
    %1304 = vmatpush1.xpose.msra.mxu0 0.0
    %1305 = vmatprep.subr.mxu0 0.0
    %1306 = vmatpush1.xpose.msra.mxu0 0.0
    %1307 = vmatprep.subr.mxu0 0.0
    %1308 = vmatpush1.xpose.msra.mxu0 0.0
    %1309 = vmatprep.subr.mxu0 0.0
    %1310 = vmatpush1.xpose.msra.mxu0 0.0
    %1311 = vmatprep.subr.mxu0 0.0
    %1312 = vmatpush1.xpose.msra.mxu0 0.0
    %1313 = vmatprep.subr.mxu0 0.0
    %1314 = vmatpush1.xpose.msra.mxu0 0.0
    %1315 = vmatprep.subr.mxu0 0.0
    %1316 = vmatpush1.xpose.msra.mxu0 0.0
    %1317 = vmatprep.subr.mxu0 0.0
    %1318 = vmatpush1.xpose.msra.mxu0 0.0
    %1319 = vmatprep.subr.mxu0 0.0
    %1320 = vmatpush1.xpose.msra.mxu0 0.0
    %1321 = vmatprep.subr.mxu0 0.0
    %1322 = vmatpush1.xpose.msra.mxu0 0.0
    %1323 = vmatprep.subr.mxu0 0.0
    %1324 = vmatpush1.xpose.msra.mxu0 0.0
    %1325 = vmatprep.subr.mxu0 0.0
    %1326 = vmatpush1.xpose.msra.mxu0 0.0
    %1327 = vmatprep.subr.mxu0 0.0
    %1328 = vmatpush1.xpose.msra.mxu0 0.0
    %1329 = vmatprep.subr.mxu0 0.0
    %1330 = vmatpush1.xpose.msra.mxu0 0.0
    %1331 = vmatprep.subr.mxu0 0.0
    %1332 = vmatpush1.xpose.msra.mxu0 0.0
    %1333 = vmatprep.subr.mxu0 0.0
    %1334 = vmatpush1.xpose.msra.mxu0 0.0
    %1335 = vmatprep.subr.mxu0 0.0
    %1336 = vmatpush1.xpose.msra.mxu0 0.0
    %1337 = vmatprep.subr.mxu0 0.0
    %1338 = vmatpush1.xpose.msra.mxu0 0.0
    %1339 = vmatprep.subr.mxu0 0.0
    %1340 = vmatpush1.xpose.msra.mxu0 0.0
    %1341 = vmatprep.subr.mxu0 0.0
    %1342 = vmatpush1.xpose.msra.mxu0 0.0
    %1343 = vmatprep.subr.mxu0 0.0
    %1344 = vmatpush1.xpose.msra.mxu0 0.0
    %1345 = vmatprep.subr.mxu0 0.0
    %1346 = vmatpush1.xpose.msra.mxu0 0.0
    %1347 = vmatprep.subr.mxu0 0.0
    %1348 = vmatpush1.xpose.msra.mxu0 0.0
    %1349 = vmatprep.subr.mxu0 0.0
    %1350 = vmatpush1.xpose.msra.mxu0 0.0
    %1351 = vmatprep.subr.mxu0 0.0
    %1352 = vmatpush1.xpose.msra.mxu0 0.0
    %1353 = vmatprep.subr.mxu0 0.0
    %1354 = vmatpush1.xpose.msra.mxu0 0.0
    %1355 = vmatprep.subr.mxu0 0.0
    %1356 = vmatpush1.xpose.msra.mxu0 0.0
    %1357 = vmatprep.subr.mxu0 0.0
    %1358 = vmatpush1.xpose.msra.mxu0 0.0
    %1359 = vmatprep.subr.mxu0 0.0
    %1360 = vmatpush1.xpose.msra.mxu0 0.0
    %1361 = vmatprep.subr.mxu0 0.0
    %1362 = vmatpush1.xpose.msra.mxu0 0.0
    %1363 = vmatprep.mubr.f32.mxu0 0.0
    %1364 = vmatmul.mubr.f32.gmra.mrb[0].mxu0 %v1295
    %v1365 = vpop.f32.mrb[0].mxu0
    %v1366 = vadd.f32 0.0, %v1365
    %v1367 = vpop.f32.mrb[0].mxu0
    %1368 = vdwg.mxu0
    %v1369 = vsel %vm203, %v1288, -inf
    %1370 = vmax.xlane.f32.xlu0 %v1369
    %v1371 = vpop.xlane.xlu0 %1370
    %v1372 = vsel %vm203, %v1366, -inf
    %1373 = vmax.xlane.f32.xlu0 %v1372
    %v1374 = vpop.xlane.xlu0 %1373
    %v1375 = vsub.f32 %v1288, %v1371
    %v1376 = vsub.f32 %v1366, %v1374
    %v1377 = vmul.f32 %v1375, 1.442695
    %v1378 = vpow.pop %v1377
    %v1379 = vmul.f32 %v1376, 1.442695
    %v1380 = vpow.pop %v1379
    %v1381 = vsel %vm203, %v1378, 0.0
    %1382 = vadd.xlane.f32.xlu0 %v1381
    %v1383 = vpop.xlane.xlu0 %1382
    %v1384 = vsel %vm203, %v1380, 0.0
    %1385 = vadd.xlane.f32.xlu0 %v1384
    %v1386 = vpop.xlane.xlu0 %1385
    %v1387 = vrcp.pop %v1383
    %v1388 = vrcp.pop %v1386
    %v1389 = vmul.f32 %v1378, %v1387
    %v1390 = vmul.f32 %v1380, %v1388
    %1391 = vrot.lane.b32.xlu0 %v192, 40
    %v1392 = vpop.permute.xlu0 %1391
    %v1395 = vsel %vm203, %v1389, 0
    %1397 = vmatprep.subr.mxu0 0.0
    %1398 = vmatpush1.msra.mxu0 %v1392
    %1399 = vmatprep.subr.mxu0 0.0
    %1400 = vmatpush1.msra.mxu0 0.0
    %1401 = vmatprep.subr.mxu0 0.0
    %1402 = vmatpush1.msra.mxu0 0.0
    %1403 = vmatprep.subr.mxu0 0.0
    %1404 = vmatpush1.msra.mxu0 0.0
    %1405 = vmatprep.subr.mxu0 0.0
    %1406 = vmatpush1.msra.mxu0 0.0
    %1407 = vmatprep.subr.mxu0 0.0
    %1408 = vmatpush1.msra.mxu0 0.0
    %1409 = vmatprep.subr.mxu0 0.0
    %1410 = vmatpush1.msra.mxu0 0.0
    %1411 = vmatprep.subr.mxu0 0.0
    %1412 = vmatpush1.msra.mxu0 0.0
    %1413 = vmatprep.subr.mxu0 0.0
    %1414 = vmatpush1.msra.mxu0 0.0
    %1415 = vmatprep.subr.mxu0 0.0
    %1416 = vmatpush1.msra.mxu0 0.0
    %1417 = vmatprep.subr.mxu0 0.0
    %1418 = vmatpush1.msra.mxu0 0.0
    %1419 = vmatprep.subr.mxu0 0.0
    %1420 = vmatpush1.msra.mxu0 0.0
    %1421 = vmatprep.subr.mxu0 0.0
    %1422 = vmatpush1.msra.mxu0 0.0
    %1423 = vmatprep.subr.mxu0 0.0
    %1424 = vmatpush1.msra.mxu0 0.0
    %1425 = vmatprep.subr.mxu0 0.0
    %1426 = vmatpush1.msra.mxu0 0.0
    %1427 = vmatprep.subr.mxu0 0.0
    %1428 = vmatpush1.msra.mxu0 0.0
    %1429 = vmatprep.subr.mxu0 0.0
    %1430 = vmatpush1.msra.mxu0 0.0
    %1431 = vmatprep.subr.mxu0 0.0
    %1432 = vmatpush1.msra.mxu0 0.0
    %1433 = vmatprep.subr.mxu0 0.0
    %1434 = vmatpush1.msra.mxu0 0.0
    %1435 = vmatprep.subr.mxu0 0.0
    %1436 = vmatpush1.msra.mxu0 0.0
    %1437 = vmatprep.subr.mxu0 0.0
    %1438 = vmatpush1.msra.mxu0 0.0
    %1439 = vmatprep.subr.mxu0 0.0
    %1440 = vmatpush1.msra.mxu0 0.0
    %1441 = vmatprep.subr.mxu0 0.0
    %1442 = vmatpush1.msra.mxu0 0.0
    %1443 = vmatprep.subr.mxu0 0.0
    %1444 = vmatpush1.msra.mxu0 0.0
    %1445 = vmatprep.subr.mxu0 0.0
    %1446 = vmatpush1.msra.mxu0 0.0
    %1447 = vmatprep.subr.mxu0 0.0
    %1448 = vmatpush1.msra.mxu0 0.0
    %1449 = vmatprep.subr.mxu0 0.0
    %1450 = vmatpush1.msra.mxu0 0.0
    %1451 = vmatprep.subr.mxu0 0.0
    %1452 = vmatpush1.msra.mxu0 0.0
    %1453 = vmatprep.subr.mxu0 0.0
    %1454 = vmatpush1.msra.mxu0 0.0
    %1455 = vmatprep.subr.mxu0 0.0
    %1456 = vmatpush1.msra.mxu0 0.0
    %1457 = vmatprep.subr.mxu0 0.0
    %1458 = vmatpush1.msra.mxu0 0.0
    %1459 = vmatprep.subr.mxu0 0.0
    %1460 = vmatpush1.msra.mxu0 0.0
    %1461 = vmatprep.mubr.f32.mxu0 0.0
    %1462 = vmatmul.mubr.f32.gmra.mrb[0].mxu0 %v1395
    %v1463 = vpop.f32.mrb[0].mxu0
    %v1464 = vadd.f32 0.0, %v1463
    %v1465 = vpop.f32.mrb[0].mxu0
    %1466 = vdwg.mxu0
    %1467 = vrot.lane.b32.xlu0 %v197, 40
    %v1468 = vpop.permute.xlu0 %1467
    %v1471 = vsel %vm203, %v1390, 0
    %1473 = vmatprep.subr.mxu0 0.0
    %1474 = vmatpush1.msra.mxu0 %v1468
    %1475 = vmatprep.subr.mxu0 0.0
    %1476 = vmatpush1.msra.mxu0 0.0
    %1477 = vmatprep.subr.mxu0 0.0
    %1478 = vmatpush1.msra.mxu0 0.0
    %1479 = vmatprep.subr.mxu0 0.0
    %1480 = vmatpush1.msra.mxu0 0.0
    %1481 = vmatprep.subr.mxu0 0.0
    %1482 = vmatpush1.msra.mxu0 0.0
    %1483 = vmatprep.subr.mxu0 0.0
    %1484 = vmatpush1.msra.mxu0 0.0
    %1485 = vmatprep.subr.mxu0 0.0
    %1486 = vmatpush1.msra.mxu0 0.0
    %1487 = vmatprep.subr.mxu0 0.0
    %1488 = vmatpush1.msra.mxu0 0.0
    %1489 = vmatprep.subr.mxu0 0.0
    %1490 = vmatpush1.msra.mxu0 0.0
    %1491 = vmatprep.subr.mxu0 0.0
    %1492 = vmatpush1.msra.mxu0 0.0
    %1493 = vmatprep.subr.mxu0 0.0
    %1494 = vmatpush1.msra.mxu0 0.0
    %1495 = vmatprep.subr.mxu0 0.0
    %1496 = vmatpush1.msra.mxu0 0.0
    %1497 = vmatprep.subr.mxu0 0.0
    %1498 = vmatpush1.msra.mxu0 0.0
    %1499 = vmatprep.subr.mxu0 0.0
    %1500 = vmatpush1.msra.mxu0 0.0
    %1501 = vmatprep.subr.mxu0 0.0
    %1502 = vmatpush1.msra.mxu0 0.0
    %1503 = vmatprep.subr.mxu0 0.0
    %1504 = vmatpush1.msra.mxu0 0.0
    %1505 = vmatprep.subr.mxu0 0.0
    %1506 = vmatpush1.msra.mxu0 0.0
    %1507 = vmatprep.subr.mxu0 0.0
    %1508 = vmatpush1.msra.mxu0 0.0
    %1509 = vmatprep.subr.mxu0 0.0
    %1510 = vmatpush1.msra.mxu0 0.0
    %1511 = vmatprep.subr.mxu0 0.0
    %1512 = vmatpush1.msra.mxu0 0.0
    %1513 = vmatprep.subr.mxu0 0.0
    %1514 = vmatpush1.msra.mxu0 0.0
    %1515 = vmatprep.subr.mxu0 0.0
    %1516 = vmatpush1.msra.mxu0 0.0
    %1517 = vmatprep.subr.mxu0 0.0
    %1518 = vmatpush1.msra.mxu0 0.0
    %1519 = vmatprep.subr.mxu0 0.0
    %1520 = vmatpush1.msra.mxu0 0.0
    %1521 = vmatprep.subr.mxu0 0.0
    %1522 = vmatpush1.msra.mxu0 0.0
    %1523 = vmatprep.subr.mxu0 0.0
    %1524 = vmatpush1.msra.mxu0 0.0
    %1525 = vmatprep.subr.mxu0 0.0
    %1526 = vmatpush1.msra.mxu0 0.0
    %1527 = vmatprep.subr.mxu0 0.0
    %1528 = vmatpush1.msra.mxu0 0.0
    %1529 = vmatprep.subr.mxu0 0.0
    %1530 = vmatpush1.msra.mxu0 0.0
    %1531 = vmatprep.subr.mxu0 0.0
    %1532 = vmatpush1.msra.mxu0 0.0
    %1533 = vmatprep.subr.mxu0 0.0
    %1534 = vmatpush1.msra.mxu0 0.0
    %1535 = vmatprep.subr.mxu0 0.0
    %1536 = vmatpush1.msra.mxu0 0.0
    %1537 = vmatprep.mubr.f32.mxu0 0.0
    %1538 = vmatmul.mubr.f32.gmra.mrb[0].mxu0 %v1471
    %v1539 = vpop.f32.mrb[0].mxu0
    %v1540 = vadd.f32 0.0, %v1539
    %v1541 = vpop.f32.mrb[0].mxu0
    %1542 = vdwg.mxu0
    %1545 = vrot.lane.b32.xlu0 %v1464, 24
    %v1546 = vpop.permute.xlu0 %1545
    %1547 = vrot.lane.b32.xlu0 %v1540, 24
    %v1548 = vpop.permute.xlu0 %1547
    %vm1551 = vcmask 261312
    %1552 = vst.msk [vmem:[#allocation2] sm:$0xff] %vm1551, %v1546
    %1553 = vst.msk [vmem:[#allocation2 + $0x8] sm:$0xff] %vm1551, %v1548
    %v1554 = vld [vmem:[#allocation2] sm:$0xff]
    %v1555 = vld [vmem:[#allocation2 + $0x8] sm:$0xff]
    %v1556 = vld [vmem:[#allocation8] sm:$0xff]
    %v1557 = vld [vmem:[#allocation8 + $0x8] sm:$0xff]
    %v1558 = vld [vmem:[#allocation8 + $0x10] sm:$0xff]
    %v1559 = vld [vmem:[#allocation8 + $0x18] sm:$0xff]
    %v1560 = vld [vmem:[%s4] sm:$0x1]
    %v1562 = vlaneseq
    %v1563 = vshrl.u32 %v1562, 7
    %v1564 = vsub.s32 0, %v1563
    %v1565 = vrot.slane %v1560, %v1564
    %v1568 = vsel %vm118, %v1554, 0
    %v1571 = vsel %vm118, %v1555, 0
    %1573 = vmatprep.subr.mxu0 0.0
    %1574 = vmatpush1.msra.mxu0 %v1556
    %1575 = vmatprep.subr.mxu0 0.0
    %1576 = vmatpush1.msra.mxu0 %v1557
    %1577 = vmatprep.subr.mxu0 0.0
    %1578 = vmatpush1.msra.mxu0 %v1558
    %1579 = vmatprep.subr.mxu0 0.0
    %1580 = vmatpush1.msra.mxu0 %v1559
    %1581 = vmatprep.subr.mxu0 0.0
    %1582 = vmatpush1.msra.mxu0 0.0
    %1583 = vmatprep.subr.mxu0 0.0
    %1584 = vmatpush1.msra.mxu0 0.0
    %1585 = vmatprep.subr.mxu0 0.0
    %1586 = vmatpush1.msra.mxu0 0.0
    %1587 = vmatprep.subr.mxu0 0.0
    %1588 = vmatpush1.msra.mxu0 0.0
    %1589 = vmatprep.subr.mxu0 0.0
    %1590 = vmatpush1.msra.mxu0 0.0
    %1591 = vmatprep.subr.mxu0 0.0
    %1592 = vmatpush1.msra.mxu0 0.0
    %1593 = vmatprep.subr.mxu0 0.0
    %1594 = vmatpush1.msra.mxu0 0.0
    %1595 = vmatprep.subr.mxu0 0.0
    %1596 = vmatpush1.msra.mxu0 0.0
    %1597 = vmatprep.subr.mxu0 0.0
    %1598 = vmatpush1.msra.mxu0 0.0
    %1599 = vmatprep.subr.mxu0 0.0
    %1600 = vmatpush1.msra.mxu0 0.0
    %1601 = vmatprep.subr.mxu0 0.0
    %1602 = vmatpush1.msra.mxu0 0.0
    %1603 = vmatprep.subr.mxu0 0.0
    %1604 = vmatpush1.msra.mxu0 0.0
    %1605 = vmatprep.subr.mxu0 0.0
    %1606 = vmatpush1.msra.mxu0 0.0
    %1607 = vmatprep.subr.mxu0 0.0
    %1608 = vmatpush1.msra.mxu0 0.0
    %1609 = vmatprep.subr.mxu0 0.0
    %1610 = vmatpush1.msra.mxu0 0.0
    %1611 = vmatprep.subr.mxu0 0.0
    %1612 = vmatpush1.msra.mxu0 0.0
    %1613 = vmatprep.subr.mxu0 0.0
    %1614 = vmatpush1.msra.mxu0 0.0
    %1615 = vmatprep.subr.mxu0 0.0
    %1616 = vmatpush1.msra.mxu0 0.0
    %1617 = vmatprep.subr.mxu0 0.0
    %1618 = vmatpush1.msra.mxu0 0.0
    %1619 = vmatprep.subr.mxu0 0.0
    %1620 = vmatpush1.msra.mxu0 0.0
    %1621 = vmatprep.subr.mxu0 0.0
    %1622 = vmatpush1.msra.mxu0 0.0
    %1623 = vmatprep.subr.mxu0 0.0
    %1624 = vmatpush1.msra.mxu0 0.0
    %1625 = vmatprep.subr.mxu0 0.0
    %1626 = vmatpush1.msra.mxu0 0.0
    %1627 = vmatprep.subr.mxu0 0.0
    %1628 = vmatpush1.msra.mxu0 0.0
    %1629 = vmatprep.subr.mxu0 0.0
    %1630 = vmatpush1.msra.mxu0 0.0
    %1631 = vmatprep.subr.mxu0 0.0
    %1632 = vmatpush1.msra.mxu0 0.0
    %1633 = vmatprep.subr.mxu0 0.0
    %1634 = vmatpush1.msra.mxu0 0.0
    %1635 = vmatprep.subr.mxu0 0.0
    %1636 = vmatpush1.msra.mxu0 0.0
    %1637 = vmatprep.mubr.f32.mxu0 0.0
    %1638 = vmatmul.mubr.f32.gmra.mrb[0].mxu0 %v1568
    %v1639 = vpop.f32.mrb[0].mxu0
    %v1640 = vadd.f32 %v1565, %v1639
    %v1641 = vpop.f32.mrb[0].mxu0
    %1642 = vmatprep.mubr.f32.mxu0 0.0
    %1643 = vmatmul.mubr.f32.gmra.mrb[0].mxu0 %v1571
    %v1644 = vpop.f32.mrb[0].mxu0
    %v1645 = vadd.f32 %v1565, %v1644
    %v1646 = vpop.f32.mrb[0].mxu0
    %1647 = vdwg.mxu0
    %v1648 = vadd.f32 %v105, %v1640
    %v1649 = vadd.f32 %v106, %v1645
    %v1650 = vld [vmem:[%s5] sm:$0xff]
    %v1651 = vld [vmem:[%s6] sm:$0xff]
    %v1652 = vsel %vm118, %v1648, 0.0
    %1653 = vadd.xlane.f32.xlu0 %v1652
    %v1654 = vpop.xlane.xlu0 %1653
    %v1655 = vsel %vm118, %v1649, 0.0
    %1656 = vadd.xlane.f32.xlu0 %v1655
    %v1657 = vpop.xlane.xlu0 %1656
    %v1658 = vrot.slane %v1654, 4
    %v1659 = vadd.f32 %v1654, %v1658
    %v1660 = vrot.slane %v1659, 2
    %v1661 = vadd.f32 %v1659, %v1660
    %v1662 = vrot.slane %v1661, 1
    %v1663 = vadd.f32 %v1661, %v1662
    %v1664 = vrot.slane %v1657, 4
    %v1665 = vadd.f32 %v1657, %v1664
    %v1666 = vrot.slane %v1665, 2
    %v1667 = vadd.f32 %v1665, %v1666
    %v1668 = vrot.slane %v1667, 1
    %v1669 = vadd.f32 %v1667, %v1668
    %v1670 = vmul.f32 %v1648, %v1648
    %v1671 = vmul.f32 %v1649, %v1649
    %v1672 = vsel %vm118, %v1670, 0.0
    %1673 = vadd.xlane.f32.xlu0 %v1672
    %v1674 = vpop.xlane.xlu0 %1673
    %v1675 = vsel %vm118, %v1671, 0.0
    %1676 = vadd.xlane.f32.xlu0 %v1675
    %v1677 = vpop.xlane.xlu0 %1676
    %v1678 = vrot.slane %v1674, 4
    %v1679 = vadd.f32 %v1674, %v1678
    %v1680 = vrot.slane %v1679, 2
    %v1681 = vadd.f32 %v1679, %v1680
    %v1682 = vrot.slane %v1681, 1
    %v1683 = vadd.f32 %v1681, %v1682
    %v1684 = vrot.slane %v1677, 4
    %v1685 = vadd.f32 %v1677, %v1684
    %v1686 = vrot.slane %v1685, 2
    %v1687 = vadd.f32 %v1685, %v1686
    %v1688 = vrot.slane %v1687, 1
    %v1689 = vadd.f32 %v1687, %v1688
    %v1690 = vmul.f32 %v1663, 0.00390625
    %v1691 = vmul.f32 %v1669, 0.00390625
    %v1692 = vmul.f32 %v1683, 0.00390625
    %v1693 = vmul.f32 %v1689, 0.00390625
    %v1694 = vmul.f32 %v1690, %v1690
    %v1695 = vmul.f32 %v1691, %v1691
    %v1696 = vsub.f32 %v1692, %v1694
    %v1697 = vsub.f32 %v1693, %v1695
    %v1698 = vsub.f32 %v1648, %v1690
    %v1699 = vsub.f32 %v1649, %v1691
    %v1700 = vadd.f32 %v1696, 1e-05
    %v1701 = vadd.f32 %v1697, 1e-05
    %v1702 = vrsqrt.pop %v1700
    %v1703 = vrsqrt.pop %v1701
    %v1704 = vmul.f32 %v1698, %v1702
    %v1705 = vmul.f32 %v1699, %v1703
    %v1706 = vmul.f32 %v1704, %v1650
    %v1707 = vmul.f32 %v1705, %v1650
    %v1708 = vadd.f32 %v1706, %v1651
    %v1709 = vadd.f32 %v1707, %v1651
    %v1710 = vld [vmem:[#allocation9] sm:$0xff]
    %v1711 = vld [vmem:[#allocation9 + $0x8] sm:$0xff]
    %v1712 = vld [vmem:[#allocation9 + $0x10] sm:$0xff]
    %v1713 = vld [vmem:[#allocation9 + $0x18] sm:$0xff]
    %v1714 = vld [vmem:[#allocation11] sm:$0x1]
    %v1716 = vlaneseq
    %v1717 = vshrl.u32 %v1716, 7
    %v1718 = vsub.s32 0, %v1717
    %v1719 = vrot.slane %v1714, %v1718
    %v1722 = vsel %vm118, %v1708, 0
    %v1725 = vsel %vm118, %v1709, 0
    %1727 = vmatprep.subr.mxu0 0.0
    %1728 = vmatpush1.msra.mxu0 %v1710
    %1729 = vmatprep.subr.mxu0 0.0
    %1730 = vmatpush1.msra.mxu0 %v1711
    %1731 = vmatprep.subr.mxu0 0.0
    %1732 = vmatpush1.msra.mxu0 %v1712
    %1733 = vmatprep.subr.mxu0 0.0
    %1734 = vmatpush1.msra.mxu0 %v1713
    %1735 = vmatprep.subr.mxu0 0.0
    %1736 = vmatpush1.msra.mxu0 0.0
    %1737 = vmatprep.subr.mxu0 0.0
    %1738 = vmatpush1.msra.mxu0 0.0
    %1739 = vmatprep.subr.mxu0 0.0
    %1740 = vmatpush1.msra.mxu0 0.0
    %1741 = vmatprep.subr.mxu0 0.0
    %1742 = vmatpush1.msra.mxu0 0.0
    %1743 = vmatprep.subr.mxu0 0.0
    %1744 = vmatpush1.msra.mxu0 0.0
    %1745 = vmatprep.subr.mxu0 0.0
    %1746 = vmatpush1.msra.mxu0 0.0
    %1747 = vmatprep.subr.mxu0 0.0
    %1748 = vmatpush1.msra.mxu0 0.0
    %1749 = vmatprep.subr.mxu0 0.0
    %1750 = vmatpush1.msra.mxu0 0.0
    %1751 = vmatprep.subr.mxu0 0.0
    %1752 = vmatpush1.msra.mxu0 0.0
    %1753 = vmatprep.subr.mxu0 0.0
    %1754 = vmatpush1.msra.mxu0 0.0
    %1755 = vmatprep.subr.mxu0 0.0
    %1756 = vmatpush1.msra.mxu0 0.0
    %1757 = vmatprep.subr.mxu0 0.0
    %1758 = vmatpush1.msra.mxu0 0.0
    %1759 = vmatprep.subr.mxu0 0.0
    %1760 = vmatpush1.msra.mxu0 0.0
    %1761 = vmatprep.subr.mxu0 0.0
    %1762 = vmatpush1.msra.mxu0 0.0
    %1763 = vmatprep.subr.mxu0 0.0
    %1764 = vmatpush1.msra.mxu0 0.0
    %1765 = vmatprep.subr.mxu0 0.0
    %1766 = vmatpush1.msra.mxu0 0.0
    %1767 = vmatprep.subr.mxu0 0.0
    %1768 = vmatpush1.msra.mxu0 0.0
    %1769 = vmatprep.subr.mxu0 0.0
    %1770 = vmatpush1.msra.mxu0 0.0
    %1771 = vmatprep.subr.mxu0 0.0
    %1772 = vmatpush1.msra.mxu0 0.0
    %1773 = vmatprep.subr.mxu0 0.0
    %1774 = vmatpush1.msra.mxu0 0.0
    %1775 = vmatprep.subr.mxu0 0.0
    %1776 = vmatpush1.msra.mxu0 0.0
    %1777 = vmatprep.subr.mxu0 0.0
    %1778 = vmatpush1.msra.mxu0 0.0
    %1779 = vmatprep.subr.mxu0 0.0
    %1780 = vmatpush1.msra.mxu0 0.0
    %1781 = vmatprep.subr.mxu0 0.0
    %1782 = vmatpush1.msra.mxu0 0.0
    %1783 = vmatprep.subr.mxu0 0.0
    %1784 = vmatpush1.msra.mxu0 0.0
    %1785 = vmatprep.subr.mxu0 0.0
    %1786 = vmatpush1.msra.mxu0 0.0
    %1787 = vmatprep.subr.mxu0 0.0
    %1788 = vmatpush1.msra.mxu0 0.0
    %1789 = vmatprep.subr.mxu0 0.0
    %1790 = vmatpush1.msra.mxu0 0.0
    %1791 = vmatprep.mubr.f32.mxu0 0.0
    %1792 = vmatmul.mubr.f32.gmra.mrb[0].mxu0 %v1722
    %v1793 = vpop.f32.mrb[0].mxu0
    %v1794 = vadd.f32 %v1719, %v1793
    %v1795 = vpop.f32.mrb[0].mxu0
    %1796 = vmatprep.mubr.f32.mxu0 0.0
    %1797 = vmatmul.mubr.f32.gmra.mrb[0].mxu0 %v1725
    %v1798 = vpop.f32.mrb[0].mxu0
    %v1799 = vadd.f32 %v1719, %v1798
    %v1800 = vpop.f32.mrb[0].mxu0
    %1801 = vdwg.mxu0
    %v1802 = vadd.f32 %v1708, %v1794
    %v1803 = vadd.f32 %v1709, %v1799
    %v1804 = vld [vmem:[%s9] sm:$0xff]
    %v1805 = vld [vmem:[%s10] sm:$0xff]
    %v1806 = vsel %vm118, %v1802, 0.0
    %1807 = vadd.xlane.f32.xlu0 %v1806
    %v1808 = vpop.xlane.xlu0 %1807
    %v1809 = vsel %vm118, %v1803, 0.0
    %1810 = vadd.xlane.f32.xlu0 %v1809
    %v1811 = vpop.xlane.xlu0 %1810
    %v1812 = vrot.slane %v1808, 4
    %v1813 = vadd.f32 %v1808, %v1812
    %v1814 = vrot.slane %v1813, 2
    %v1815 = vadd.f32 %v1813, %v1814
    %v1816 = vrot.slane %v1815, 1
    %v1817 = vadd.f32 %v1815, %v1816
    %v1818 = vrot.slane %v1811, 4
    %v1819 = vadd.f32 %v1811, %v1818
    %v1820 = vrot.slane %v1819, 2
    %v1821 = vadd.f32 %v1819, %v1820
    %v1822 = vrot.slane %v1821, 1
    %v1823 = vadd.f32 %v1821, %v1822
    %v1824 = vmul.f32 %v1802, %v1802
    %v1825 = vmul.f32 %v1803, %v1803
    %v1826 = vsel %vm118, %v1824, 0.0
    %1827 = vadd.xlane.f32.xlu0 %v1826
    %v1828 = vpop.xlane.xlu0 %1827
    %v1829 = vsel %vm118, %v1825, 0.0
    %1830 = vadd.xlane.f32.xlu0 %v1829
    %v1831 = vpop.xlane.xlu0 %1830
    %v1832 = vrot.slane %v1828, 4
    %v1833 = vadd.f32 %v1828, %v1832
    %v1834 = vrot.slane %v1833, 2
    %v1835 = vadd.f32 %v1833, %v1834
    %v1836 = vrot.slane %v1835, 1
    %v1837 = vadd.f32 %v1835, %v1836
    %v1838 = vrot.slane %v1831, 4
    %v1839 = vadd.f32 %v1831, %v1838
    %v1840 = vrot.slane %v1839, 2
    %v1841 = vadd.f32 %v1839, %v1840
    %v1842 = vrot.slane %v1841, 1
    %v1843 = vadd.f32 %v1841, %v1842
    %v1844 = vmul.f32 %v1817, 0.00390625
    %v1845 = vmul.f32 %v1823, 0.00390625
    %v1846 = vmul.f32 %v1837, 0.00390625
    %v1847 = vmul.f32 %v1843, 0.00390625
    %v1848 = vmul.f32 %v1844, %v1844
    %v1849 = vmul.f32 %v1845, %v1845
    %v1850 = vsub.f32 %v1846, %v1848
    %v1851 = vsub.f32 %v1847, %v1849
    %v1852 = vsub.f32 %v1802, %v1844
    %v1853 = vsub.f32 %v1803, %v1845
    %v1854 = vadd.f32 %v1850, 1e-05
    %v1855 = vadd.f32 %v1851, 1e-05
    %v1856 = vrsqrt.pop %v1854
    %v1857 = vrsqrt.pop %v1855
    %v1858 = vmul.f32 %v1852, %v1856
    %v1859 = vmul.f32 %v1853, %v1857
    %v1860 = vmul.f32 %v1858, %v1804
    %v1861 = vmul.f32 %v1859, %v1804
    %v1862 = vadd.f32 %v1860, %v1805
    %v1863 = vadd.f32 %v1861, %v1805
    %1864 = vst.msk [vmem:[#allocation12] sm:$0xff] %vm118, %v1862
    %1865 = vst.msk [vmem:[#allocation12 + $0x8] sm:$0xff] %vm118, %v1863
    // Predicated region
    $region66: #{tpu_custom_call.1} parent=1 // pred_check
      _
    $region67: #{tpu_custom_call.1} parent=1 // pred_check_branch
      %1867 = sbr.rel (0) target = $region69
    $region68: #{tpu_custom_call.1} parent=1 // pred_region
      %s1869 = ssub.s32 256, 256
      %1870 = vsyncadd [#allocation5], %s1869
      %s1871 = sshll.u32 [#allocation12], 4
      %s1872 = int_to_ptr.vmem [resolvable:$true] %s1871
      %1877 = dma.vmem_to_hbm [thread:$0]  %s1872, 256, %s11, [#allocation5], 128, 128, 8
    $region69: #{tpu_custom_call.1} parent=1 // pred_fallthru
      _
    // Predicated region
    $region70: #{tpu_custom_call.1} parent=1 // pred_check
      _
    $region71: #{tpu_custom_call.1} parent=1 // pred_check_branch
      %1879 = sbr.rel (0) target = $region73
    $region72: #{tpu_custom_call.1} parent=1 // pred_region
      %1880 = dma.done [#allocation5], 256
    $region73: #{tpu_custom_call.1} parent=1 // pred_fallthru
      _
    %1881 = vsyncpa [#allocation4], 1
    %1882 = vsyncpa [#allocation7], 1
    %1883 = vsyncpa [#allocation10], 1
    %1884 = vsyncpa [#allocation5], 1

</llo_original>
